<compile_context>
chip_gen: v6e
topology: v6e:2x2x1
jax: 0.10.0
libtpu: 0.0.40
codegen_flags: <defaults>
</compile_context>

<pallas_src>
import math

import jax
import jax.numpy as jnp
from jax import lax
from jax.experimental import pallas as pl
from jax.experimental.pallas import tpu as pltpu

# --- tiny-BERT config (small shapes consistent with the module structure) ---
VOCAB = 100
MAX_POS = 32
TYPE_VOCAB = 2
HIDDEN = 32
HEADS = 4
HEAD_DIM = HIDDEN // HEADS
INTER = 64
LAYERS = 2
B = 2
S = 8
BS = B * S                 # 16 rows of activations
RB = HEADS * BS            # 64 stacked (head, batch, seq) rows for attention


# ----------------------------- in-kernel helpers ----------------------------

def _layernorm(x, g, b):
    # single-pass: mean and mean-of-squares are independent reductions
    mean = jnp.mean(x, axis=-1, keepdims=True)
    msq = jnp.mean(x * x, axis=-1, keepdims=True)
    var = msq - mean * mean
    return (x - mean) * lax.rsqrt(var + 1e-12) * g + b


def _gelu_tanh(x):
    c = math.sqrt(2.0 / math.pi)
    return 0.5 * x * (1.0 + jnp.tanh(c * (x + 0.044715 * x * x * x)))


# ------------------------------ fused kernel --------------------------------

def _bert_kernel(ids_ref, tt_ref, bias_ref,
                 word_emb_ref, pos_emb_ref, type_emb_ref, emb_g_ref, emb_b_ref,
                 qkv_w_ref, qkv_b_ref, o_w_ref, o_b_ref, ln1_g_ref, ln1_b_ref,
                 i_w_ref, i_b_ref, out_w_ref, out_b_ref, ln2_g_ref, ln2_b_ref,
                 pool_w_ref, pool_b_ref, cls_w_ref, cls_b_ref,
                 logits_ref):
    f32 = jnp.float32
    bf16 = jnp.bfloat16
    D = HEAD_DIM

    # ---- embeddings: one-hot gather (MXU, bf16) + position tile + type select
    wid = ids_ref[...]                                               # (BS, 1) int32
    tid = tt_ref[...]                                                # (BS, 1) int32
    onehot = (wid == lax.broadcasted_iota(jnp.int32, (BS, VOCAB), 1)).astype(bf16)
    word_e = jnp.dot(onehot, word_emb_ref[...], preferred_element_type=f32)   # (BS, H)
    pos = pos_emb_ref[0:S, :]                                        # (S, H)
    pos_e = jnp.concatenate([pos] * B, axis=0)                       # (BS, H)
    # TYPE_VOCAB == 2 -> vectorized select instead of a gather.
    type_e = jnp.where(tid == 0, type_emb_ref[0:1, :], type_emb_ref[1:2, :])  # (BS, H)
    h = _layernorm(word_e + pos_e + type_e, emb_g_ref[...], emb_b_ref[...])   # (BS, H)

    # additive attention bias over the stacked (head, batch, seq) score matrix:
    # block-diagonal (kills cross-head / cross-batch blocks) + key padding.
    bias = bias_ref[...]                                             # (RB, RB) f32

    # ---- encoder layers (static unroll) ----
    for l in range(LAYERS):
        # fused QKV projection; qkv_w columns are head-major [q_h | k_h | v_h],
        # Q columns already carry the 1/sqrt(D) score scale.
        qkv = (jnp.dot(h.astype(bf16), qkv_w_ref[l], preferred_element_type=f32)
               + qkv_b_ref[l])                                       # (BS, 3*H) f32

        # stack heads into sublanes: row order (head, batch, seq)
        qkv_st = jnp.concatenate(
            [qkv[:, hh * 3 * D:(hh + 1) * 3 * D] for hh in range(HEADS)],
            axis=0)                                                  # (RB, 3*D)
        q_st = qkv_st[:, 0:D].astype(bf16)                           # (RB, D)
        k_st = qkv_st[:, D:2 * D].astype(bf16)                       # (RB, D)
        v_st = qkv_st[:, 2 * D:3 * D].astype(bf16)                   # (RB, D)

        # single QK^T pass for all heads/batches; off-block entries masked out
        sc = lax.dot_general(q_st, k_st, (((1,), (1,)), ((), ())),
                             preferred_element_type=f32)             # (RB, RB)
        sc = sc + bias
        sc = sc - jnp.max(sc, axis=-1, keepdims=True)
        p = jnp.exp(sc)
        p = p * pl.reciprocal(jnp.sum(p, axis=-1, keepdims=True), approx=True)

        ctx_st = jnp.dot(p.astype(bf16), v_st, preferred_element_type=f32)    # (RB, D)
        # merge heads back to (BS, HIDDEN): head h -> lanes [h*D:(h+1)*D]
        ctx = jnp.concatenate(
            [ctx_st[hh * BS:(hh + 1) * BS, :] for hh in range(HEADS)],
            axis=1)                                                  # (BS, H)

        attn = (jnp.dot(ctx.astype(bf16), o_w_ref[l], preferred_element_type=f32)
                + o_b_ref[l])
        h = _layernorm(attn + h, ln1_g_ref[l], ln1_b_ref[l])         # residual folded in

        inter = _gelu_tanh(
            jnp.dot(h.astype(bf16), i_w_ref[l], preferred_element_type=f32)
            + i_b_ref[l])                                            # (BS, INTER)
        ffn = (jnp.dot(inter.astype(bf16), out_w_ref[l], preferred_element_type=f32)
               + out_b_ref[l])
        h = _layernorm(ffn + h, ln2_g_ref[l], ln2_b_ref[l])

    # ---- pooler (tanh(Linear([CLS]))) — batched over B — + classifier head ----
    cls_tok = jnp.concatenate([h[bb * S:bb * S + 1, :] for bb in range(B)], axis=0)  # (B, H)
    pooled = jnp.tanh(
        jnp.dot(cls_tok.astype(bf16), pool_w_ref[...], preferred_element_type=f32)
        + pool_b_ref[...])                                           # (B, H)
    # classifier: VPU multiply + cross-lane reduce instead of an M=1,N=1 matmul
    logits = jnp.sum(pooled * cls_w_ref[...], axis=-1, keepdims=True) + cls_b_ref[...]
    logits_ref[...] = logits                                         # (B, 1)


# ----------------------------- parameter init -------------------------------

def init_params(key):
    def nrm(k, shape):
        return 0.02 * jax.random.normal(k, shape, dtype=jnp.float32)

    ks = iter(jax.random.split(key, 32))
    D = HEAD_DIM
    scale = 1.0 / math.sqrt(D)

    # standard separate Q/K/V weights, then fused head-major [q_h | k_h | v_h];
    # the 1/sqrt(D) attention scale is folded into the Q columns (and would be
    # folded into the Q bias too if it were nonzero).
    qw = nrm(next(ks), (LAYERS, HIDDEN, HIDDEN)) * scale
    kw = nrm(next(ks), (LAYERS, HIDDEN, HIDDEN))
    vw = nrm(next(ks), (LAYERS, HIDDEN, HIDDEN))
    qb = jnp.zeros((LAYERS, 1, HIDDEN), jnp.float32)
    kb = jnp.zeros((LAYERS, 1, HIDDEN), jnp.float32)
    vb = jnp.zeros((LAYERS, 1, HIDDEN), jnp.float32)

    def fuse_qkv(q, k, v):
        l, x, _ = q.shape
        qh = q.reshape(l, x, HEADS, D)
        kh = k.reshape(l, x, HEADS, D)
        vh = v.reshape(l, x, HEADS, D)
        return jnp.concatenate([qh, kh, vh], axis=-1).reshape(l, x, HEADS * 3 * D)

    bf16 = jnp.bfloat16
    return {
        # matmul weights stored in bf16 (MXU-native); biases / LN params in f32
        "word_emb": nrm(next(ks), (VOCAB, HIDDEN)).astype(bf16),
        "pos_emb": nrm(next(ks), (MAX_POS, HIDDEN)),
        "type_emb": nrm(next(ks), (TYPE_VOCAB, HIDDEN)),
        "emb_ln_g": jnp.ones((1, HIDDEN), jnp.float32),
        "emb_ln_b": jnp.zeros((1, HIDDEN), jnp.float32),
        "qkv_w": fuse_qkv(qw, kw, vw).astype(bf16),                  # (L, H, 3H) head-major
        "qkv_b": fuse_qkv(qb, kb, vb),                               # (L, 1, 3H) f32
        "o_w": nrm(next(ks), (LAYERS, HIDDEN, HIDDEN)).astype(bf16),
        "o_b": jnp.zeros((LAYERS, 1, HIDDEN), jnp.float32),
        "ln1_g": jnp.ones((LAYERS, 1, HIDDEN), jnp.float32),
        "ln1_b": jnp.zeros((LAYERS, 1, HIDDEN), jnp.float32),
        "i_w": nrm(next(ks), (LAYERS, HIDDEN, INTER)).astype(bf16),
        "i_b": jnp.zeros((LAYERS, 1, INTER), jnp.float32),
        "out_w": nrm(next(ks), (LAYERS, INTER, HIDDEN)).astype(bf16),
        "out_b": jnp.zeros((LAYERS, 1, HIDDEN), jnp.float32),
        "ln2_g": jnp.ones((LAYERS, 1, HIDDEN), jnp.float32),
        "ln2_b": jnp.zeros((LAYERS, 1, HIDDEN), jnp.float32),
        "pool_w": nrm(next(ks), (HIDDEN, HIDDEN)).astype(bf16),
        "pool_b": jnp.zeros((1, HIDDEN), jnp.float32),
        "cls_w": nrm(next(ks), (1, HIDDEN)),                         # row vector (VPU reduce)
        "cls_b": jnp.zeros((1, 1), jnp.float32),
    }


# ------------------------------ forward pass --------------------------------

def bert_classifier_forward(params, input_ids, token_type_ids, attention_mask):
    b, s = input_ids.shape
    assert b == B and s == S, "batch/seq must match kernel constants"

    ids = input_ids.astype(jnp.int32).reshape(BS, 1)
    tts = token_type_ids.astype(jnp.int32).reshape(BS, 1)

    # Extended attention bias for the stacked (head, batch, seq) score matrix:
    # keep only same-(head, batch) blocks and un-padded keys (layout plumbing,
    # equivalent to HF's get_extended_attention_mask).
    blk = jnp.arange(RB, dtype=jnp.int32) // S                       # unique per (head, batch)
    keep_blk = blk[:, None] == blk[None, :]                          # (RB, RB)
    key_keep = jnp.tile(attention_mask.reshape(1, BS) > 0, (1, HEADS))  # (1, RB), (h,b,s) cols
    attn_bias = jnp.where(keep_blk & key_keep, 0.0, -1e9).astype(jnp.float32)

    weights = [
        params["word_emb"], params["pos_emb"], params["type_emb"],
        params["emb_ln_g"], params["emb_ln_b"],
        params["qkv_w"], params["qkv_b"], params["o_w"], params["o_b"],
        params["ln1_g"], params["ln1_b"], params["i_w"], params["i_b"],
        params["out_w"], params["out_b"], params["ln2_g"], params["ln2_b"],
        params["pool_w"], params["pool_b"], params["cls_w"], params["cls_b"],
    ]
    inputs = [ids, tts, attn_bias] + weights

    # Single program (no grid): the whole batch fits in a fraction of VMEM, and
    # the grid would only add per-step overhead on single-TensorCore chips.
    logits = pl.pallas_call(
        _bert_kernel,
        out_shape=jax.ShapeDtypeStruct((B, 1), jnp.float32),
        in_specs=[pl.BlockSpec(memory_space=pltpu.MemorySpace.VMEM)
                  for _ in inputs],
        out_specs=pl.BlockSpec(memory_space=pltpu.MemorySpace.VMEM),
    )(*inputs)

    return logits   # (B, 1)


if __name__ == "__main__":
    key = jax.random.PRNGKey(0)
    pkey, ikey = jax.random.split(key)
    params = init_params(pkey)

    input_ids = jax.random.randint(ikey, (B, S), 0, VOCAB, dtype=jnp.int32)
    token_type_ids = jnp.zeros((B, S), dtype=jnp.int32)
    attention_mask = jnp.ones((B, S), dtype=jnp.int32)

    fwd = jax.jit(bert_classifier_forward)
    logits = fwd(params, input_ids, token_type_ids, attention_mask)
    jax.block_until_ready(logits)
    assert logits.shape == (B, 1) and logits.dtype == jnp.float32
    assert bool(jnp.all(jnp.isfinite(logits)))
    print("KERNEL_OK")
</pallas_src>

<mosaic_0001>
module attributes {stable_mosaic.version = 11 : i64} {
  func.func @_bert_kernel(%arg0: memref<16x1xi32, #tpu.memory_space<vmem>>, %arg1: memref<16x1xi32, #tpu.memory_space<vmem>>, %arg2: memref<64x64xf32, #tpu.memory_space<vmem>>, %arg3: memref<100x32xbf16, #tpu.memory_space<vmem>>, %arg4: memref<32x32xf32, #tpu.memory_space<vmem>>, %arg5: memref<2x32xf32, #tpu.memory_space<vmem>>, %arg6: memref<1x32xf32, #tpu.memory_space<vmem>>, %arg7: memref<1x32xf32, #tpu.memory_space<vmem>>, %arg8: memref<2x32x96xbf16, #tpu.memory_space<vmem>>, %arg9: memref<2x1x96xf32, #tpu.memory_space<vmem>>, %arg10: memref<2x32x32xbf16, #tpu.memory_space<vmem>>, %arg11: memref<2x1x32xf32, #tpu.memory_space<vmem>>, %arg12: memref<2x1x32xf32, #tpu.memory_space<vmem>>, %arg13: memref<2x1x32xf32, #tpu.memory_space<vmem>>, %arg14: memref<2x32x64xbf16, #tpu.memory_space<vmem>>, %arg15: memref<2x1x64xf32, #tpu.memory_space<vmem>>, %arg16: memref<2x64x32xbf16, #tpu.memory_space<vmem>>, %arg17: memref<2x1x32xf32, #tpu.memory_space<vmem>>, %arg18: memref<2x1x32xf32, #tpu.memory_space<vmem>>, %arg19: memref<2x1x32xf32, #tpu.memory_space<vmem>>, %arg20: memref<32x32xbf16, #tpu.memory_space<vmem>>, %arg21: memref<1x32xf32, #tpu.memory_space<vmem>>, %arg22: memref<1x32xf32, #tpu.memory_space<vmem>>, %arg23: memref<1x1xf32, #tpu.memory_space<vmem>>, %arg24: memref<2x1xf32, #tpu.memory_space<vmem>>) attributes {dimension_semantics = [], scalar_prefetch = 0 : i64, scratch_operands = 0 : i64, tpu.core_type = #tpu.core_type<tc>} {
    %c0 = arith.constant 0 : index
    %c0_0 = arith.constant 0 : index
    %0 = vector.load %arg0[%c0, %c0_0] : memref<16x1xi32, #tpu.memory_space<vmem>>, vector<16x1xi32>
    %c0_1 = arith.constant 0 : index
    %c0_2 = arith.constant 0 : index
    %1 = vector.load %arg1[%c0_1, %c0_2] : memref<16x1xi32, #tpu.memory_space<vmem>>, vector<16x1xi32>
    %2 = tpu.iota {dimensions = array<i32: 1>} : vector<16x100xi32>
    %3 = vector.broadcast %0 : vector<16x1xi32> to vector<16x100xi32>
    %4 = arith.cmpi eq, %3, %2 : vector<16x100xi32>
    %5 = arith.extui %4 : vector<16x100xi1> to vector<16x100xi32>
    %6 = arith.sitofp %5 : vector<16x100xi32> to vector<16x100xf32>
    %7 = arith.truncf %6 : vector<16x100xf32> to vector<16x100xbf16>
    %c0_3 = arith.constant 0 : index
    %c0_4 = arith.constant 0 : index
    %8 = vector.load %arg3[%c0_3, %c0_4] : memref<100x32xbf16, #tpu.memory_space<vmem>>, vector<100x32xbf16>
    %cst = arith.constant dense<0.000000e+00> : vector<16x32xf32>
    %9 = tpu.matmul %7, %8, %cst {dimension_numbers = #tpu.dot_dimension_numbers<[1], [0], [0], [1], [0, 0, 1, 1], [], []>} : vector<16x100xbf16>, vector<100x32xbf16>, vector<16x32xf32> -> vector<16x32xf32>
    %c0_5 = arith.constant 0 : index
    %c0_6 = arith.constant 0 : index
    %10 = vector.load %arg4[%c0_5, %c0_6] : memref<32x32xf32, #tpu.memory_space<vmem>>, vector<8x32xf32>
    %11 = tpu.concatenate %10, %10 in 0 : vector<8x32xf32>, vector<8x32xf32> -> vector<16x32xf32>
    %c0_i32 = arith.constant 0 : i32
    %12 = vector.broadcast %c0_i32 : i32 to vector<16x1xi32>
    %13 = arith.cmpi eq, %1, %12 : vector<16x1xi32>
    %c0_7 = arith.constant 0 : index
    %c0_8 = arith.constant 0 : index
    %14 = vector.load %arg5[%c0_7, %c0_8] : memref<2x32xf32, #tpu.memory_space<vmem>>, vector<1x32xf32>
    %c1 = arith.constant 1 : index
    %c0_9 = arith.constant 0 : index
    %15 = vector.load %arg5[%c1, %c0_9] : memref<2x32xf32, #tpu.memory_space<vmem>>, vector<1x32xf32>
    %16 = vector.shape_cast %13 : vector<16x1xi1> to vector<16x1xi1>
    %17 = vector.broadcast %16 : vector<16x1xi1> to vector<16x32xi1>
    %18 = vector.shape_cast %14 : vector<1x32xf32> to vector<1x32xf32>
    %19 = vector.broadcast %18 : vector<1x32xf32> to vector<16x32xf32>
    %20 = vector.shape_cast %15 : vector<1x32xf32> to vector<1x32xf32>
    %21 = vector.broadcast %20 : vector<1x32xf32> to vector<16x32xf32>
    %22 = arith.select %17, %19, %21 : vector<16x32xi1>, vector<16x32xf32>
    %23 = arith.addf %9, %11 : vector<16x32xf32>
    %24 = arith.addf %23, %22 : vector<16x32xf32>
    %c0_10 = arith.constant 0 : index
    %c0_11 = arith.constant 0 : index
    %25 = vector.load %arg6[%c0_10, %c0_11] : memref<1x32xf32, #tpu.memory_space<vmem>>, vector<1x32xf32>
    %c0_12 = arith.constant 0 : index
    %c0_13 = arith.constant 0 : index
    %26 = vector.load %arg7[%c0_12, %c0_13] : memref<1x32xf32, #tpu.memory_space<vmem>>, vector<1x32xf32>
    %cst_14 = arith.constant dense<0.000000e+00> : vector<16xf32>
    %27 = vector.multi_reduction <add>, %24, %cst_14 [1] : vector<16x32xf32> to vector<16xf32>
    %28 = vector.shape_cast %27 : vector<16xf32> to vector<16x1xf32>
    %cst_15 = arith.constant 3.200000e+01 : f32
    %29 = vector.broadcast %cst_15 : f32 to vector<16x1xf32>
    %30 = arith.divf %28, %29 : vector<16x1xf32>
    %31 = arith.mulf %24, %24 : vector<16x32xf32>
    %cst_16 = arith.constant dense<0.000000e+00> : vector<16xf32>
    %32 = vector.multi_reduction <add>, %31, %cst_16 [1] : vector<16x32xf32> to vector<16xf32>
    %33 = vector.shape_cast %32 : vector<16xf32> to vector<16x1xf32>
    %cst_17 = arith.constant 3.200000e+01 : f32
    %34 = vector.broadcast %cst_17 : f32 to vector<16x1xf32>
    %35 = arith.divf %33, %34 : vector<16x1xf32>
    %36 = arith.mulf %30, %30 : vector<16x1xf32>
    %37 = arith.subf %35, %36 : vector<16x1xf32>
    %38 = vector.broadcast %30 : vector<16x1xf32> to vector<16x32xf32>
    %39 = arith.subf %24, %38 : vector<16x32xf32>
    %cst_18 = arith.constant 9.99999996E-13 : f32
    %40 = vector.broadcast %cst_18 : f32 to vector<16x1xf32>
    %41 = arith.addf %37, %40 : vector<16x1xf32>
    %42 = math.rsqrt %41 : vector<16x1xf32>
    %43 = vector.broadcast %42 : vector<16x1xf32> to vector<16x32xf32>
    %44 = arith.mulf %39, %43 : vector<16x32xf32>
    %45 = vector.broadcast %25 : vector<1x32xf32> to vector<16x32xf32>
    %46 = arith.mulf %44, %45 : vector<16x32xf32>
    %47 = vector.broadcast %26 : vector<1x32xf32> to vector<16x32xf32>
    %48 = arith.addf %46, %47 : vector<16x32xf32>
    %c0_19 = arith.constant 0 : index
    %c0_20 = arith.constant 0 : index
    %49 = vector.load %arg2[%c0_19, %c0_20] : memref<64x64xf32, #tpu.memory_space<vmem>>, vector<64x64xf32>
    %50 = arith.truncf %48 : vector<16x32xf32> to vector<16x32xbf16>
    %c0_21 = arith.constant 0 : index
    %c0_22 = arith.constant 0 : index
    %c0_23 = arith.constant 0 : index
    %51 = vector.load %arg8[%c0_21, %c0_22, %c0_23] : memref<2x32x96xbf16, #tpu.memory_space<vmem>>, vector<1x32x96xbf16>
    %52 = vector.shape_cast %51 : vector<1x32x96xbf16> to vector<32x96xbf16>
    %cst_24 = arith.constant dense<0.000000e+00> : vector<16x96xf32>
    %53 = tpu.matmul %50, %52, %cst_24 {dimension_numbers = #tpu.dot_dimension_numbers<[1], [0], [0], [1], [0, 0, 1, 1], [], []>} : vector<16x32xbf16>, vector<32x96xbf16>, vector<16x96xf32> -> vector<16x96xf32>
    %c0_25 = arith.constant 0 : index
    %c0_26 = arith.constant 0 : index
    %c0_27 = arith.constant 0 : index
    %54 = vector.load %arg9[%c0_25, %c0_26, %c0_27] : memref<2x1x96xf32, #tpu.memory_space<vmem>>, vector<1x1x96xf32>
    %55 = vector.shape_cast %54 : vector<1x1x96xf32> to vector<1x96xf32>
    %56 = vector.broadcast %55 : vector<1x96xf32> to vector<16x96xf32>
    %57 = arith.addf %53, %56 : vector<16x96xf32>
    %58 = vector.extract_strided_slice %57 {offsets = [0, 0], sizes = [16, 24], strides = [1, 1]} : vector<16x96xf32> to vector<16x24xf32>
    %59 = vector.extract_strided_slice %57 {offsets = [0, 24], sizes = [16, 24], strides = [1, 1]} : vector<16x96xf32> to vector<16x24xf32>
    %60 = vector.extract_strided_slice %57 {offsets = [0, 48], sizes = [16, 24], strides = [1, 1]} : vector<16x96xf32> to vector<16x24xf32>
    %61 = vector.extract_strided_slice %57 {offsets = [0, 72], sizes = [16, 24], strides = [1, 1]} : vector<16x96xf32> to vector<16x24xf32>
    %62 = tpu.concatenate %58, %59, %60, %61 in 0 : vector<16x24xf32>, vector<16x24xf32>, vector<16x24xf32>, vector<16x24xf32> -> vector<64x24xf32>
    %63 = vector.extract_strided_slice %62 {offsets = [0, 0], sizes = [64, 8], strides = [1, 1]} : vector<64x24xf32> to vector<64x8xf32>
    %64 = arith.truncf %63 : vector<64x8xf32> to vector<64x8xbf16>
    %65 = vector.extract_strided_slice %62 {offsets = [0, 8], sizes = [64, 8], strides = [1, 1]} : vector<64x24xf32> to vector<64x8xf32>
    %66 = arith.truncf %65 : vector<64x8xf32> to vector<64x8xbf16>
    %67 = vector.extract_strided_slice %62 {offsets = [0, 16], sizes = [64, 8], strides = [1, 1]} : vector<64x24xf32> to vector<64x8xf32>
    %68 = arith.truncf %67 : vector<64x8xf32> to vector<64x8xbf16>
    %cst_28 = arith.constant dense<0.000000e+00> : vector<64x64xf32>
    %69 = tpu.matmul %64, %66, %cst_28 {dimension_numbers = #tpu.dot_dimension_numbers<[1], [1], [0], [0], [0, 0, 1, 0], [], []>} : vector<64x8xbf16>, vector<64x8xbf16>, vector<64x64xf32> -> vector<64x64xf32>
    %70 = arith.addf %69, %49 : vector<64x64xf32>
    %cst_29 = arith.constant dense<0xFF800000> : vector<64xf32>
    %71 = vector.multi_reduction <maximumf>, %70, %cst_29 [1] : vector<64x64xf32> to vector<64xf32>
    %72 = vector.shape_cast %71 : vector<64xf32> to vector<64x1xf32>
    %73 = vector.broadcast %72 : vector<64x1xf32> to vector<64x64xf32>
    %74 = arith.subf %70, %73 : vector<64x64xf32>
    %75 = math.exp %74 : vector<64x64xf32>
    %cst_30 = arith.constant dense<0.000000e+00> : vector<64xf32>
    %76 = vector.multi_reduction <add>, %75, %cst_30 [1] : vector<64x64xf32> to vector<64xf32>
    %77 = vector.shape_cast %76 : vector<64xf32> to vector<64x1xf32>
    %78 = tpu.reciprocal %77 {approx = true} : vector<64x1xf32> -> vector<64x1xf32>
    %79 = vector.broadcast %78 : vector<64x1xf32> to vector<64x64xf32>
    %80 = arith.mulf %75, %79 : vector<64x64xf32>
    %81 = arith.truncf %80 : vector<64x64xf32> to vector<64x64xbf16>
    %cst_31 = arith.constant dense<0.000000e+00> : vector<64x8xf32>
    %82 = tpu.matmul %81, %68, %cst_31 {dimension_numbers = #tpu.dot_dimension_numbers<[1], [0], [0], [1], [0, 0, 1, 1], [], []>} : vector<64x64xbf16>, vector<64x8xbf16>, vector<64x8xf32> -> vector<64x8xf32>
    %83 = vector.extract_strided_slice %82 {offsets = [0, 0], sizes = [16, 8], strides = [1, 1]} : vector<64x8xf32> to vector<16x8xf32>
    %84 = vector.extract_strided_slice %82 {offsets = [16, 0], sizes = [16, 8], strides = [1, 1]} : vector<64x8xf32> to vector<16x8xf32>
    %85 = vector.extract_strided_slice %82 {offsets = [32, 0], sizes = [16, 8], strides = [1, 1]} : vector<64x8xf32> to vector<16x8xf32>
    %86 = vector.extract_strided_slice %82 {offsets = [48, 0], sizes = [16, 8], strides = [1, 1]} : vector<64x8xf32> to vector<16x8xf32>
    %87 = tpu.concatenate %83, %84, %85, %86 in 1 : vector<16x8xf32>, vector<16x8xf32>, vector<16x8xf32>, vector<16x8xf32> -> vector<16x32xf32>
    %88 = arith.truncf %87 : vector<16x32xf32> to vector<16x32xbf16>
    %c0_32 = arith.constant 0 : index
    %c0_33 = arith.constant 0 : index
    %c0_34 = arith.constant 0 : index
    %89 = vector.load %arg10[%c0_32, %c0_33, %c0_34] : memref<2x32x32xbf16, #tpu.memory_space<vmem>>, vector<1x32x32xbf16>
    %90 = vector.shape_cast %89 : vector<1x32x32xbf16> to vector<32x32xbf16>
    %cst_35 = arith.constant dense<0.000000e+00> : vector<16x32xf32>
    %91 = tpu.matmul %88, %90, %cst_35 {dimension_numbers = #tpu.dot_dimension_numbers<[1], [0], [0], [1], [0, 0, 1, 1], [], []>} : vector<16x32xbf16>, vector<32x32xbf16>, vector<16x32xf32> -> vector<16x32xf32>
    %c0_36 = arith.constant 0 : index
    %c0_37 = arith.constant 0 : index
    %c0_38 = arith.constant 0 : index
    %92 = vector.load %arg11[%c0_36, %c0_37, %c0_38] : memref<2x1x32xf32, #tpu.memory_space<vmem>>, vector<1x1x32xf32>
    %93 = vector.shape_cast %92 : vector<1x1x32xf32> to vector<1x32xf32>
    %94 = vector.broadcast %93 : vector<1x32xf32> to vector<16x32xf32>
    %95 = arith.addf %91, %94 : vector<16x32xf32>
    %96 = arith.addf %95, %48 : vector<16x32xf32>
    %c0_39 = arith.constant 0 : index
    %c0_40 = arith.constant 0 : index
    %c0_41 = arith.constant 0 : index
    %97 = vector.load %arg12[%c0_39, %c0_40, %c0_41] : memref<2x1x32xf32, #tpu.memory_space<vmem>>, vector<1x1x32xf32>
    %98 = vector.shape_cast %97 : vector<1x1x32xf32> to vector<1x32xf32>
    %c0_42 = arith.constant 0 : index
    %c0_43 = arith.constant 0 : index
    %c0_44 = arith.constant 0 : index
    %99 = vector.load %arg13[%c0_42, %c0_43, %c0_44] : memref<2x1x32xf32, #tpu.memory_space<vmem>>, vector<1x1x32xf32>
    %100 = vector.shape_cast %99 : vector<1x1x32xf32> to vector<1x32xf32>
    %cst_45 = arith.constant dense<0.000000e+00> : vector<16xf32>
    %101 = vector.multi_reduction <add>, %96, %cst_45 [1] : vector<16x32xf32> to vector<16xf32>
    %102 = vector.shape_cast %101 : vector<16xf32> to vector<16x1xf32>
    %cst_46 = arith.constant 3.200000e+01 : f32
    %103 = vector.broadcast %cst_46 : f32 to vector<16x1xf32>
    %104 = arith.divf %102, %103 : vector<16x1xf32>
    %105 = arith.mulf %96, %96 : vector<16x32xf32>
    %cst_47 = arith.constant dense<0.000000e+00> : vector<16xf32>
    %106 = vector.multi_reduction <add>, %105, %cst_47 [1] : vector<16x32xf32> to vector<16xf32>
    %107 = vector.shape_cast %106 : vector<16xf32> to vector<16x1xf32>
    %cst_48 = arith.constant 3.200000e+01 : f32
    %108 = vector.broadcast %cst_48 : f32 to vector<16x1xf32>
    %109 = arith.divf %107, %108 : vector<16x1xf32>
    %110 = arith.mulf %104, %104 : vector<16x1xf32>
    %111 = arith.subf %109, %110 : vector<16x1xf32>
    %112 = vector.broadcast %104 : vector<16x1xf32> to vector<16x32xf32>
    %113 = arith.subf %96, %112 : vector<16x32xf32>
    %cst_49 = arith.constant 9.99999996E-13 : f32
    %114 = vector.broadcast %cst_49 : f32 to vector<16x1xf32>
    %115 = arith.addf %111, %114 : vector<16x1xf32>
    %116 = math.rsqrt %115 : vector<16x1xf32>
    %117 = vector.broadcast %116 : vector<16x1xf32> to vector<16x32xf32>
    %118 = arith.mulf %113, %117 : vector<16x32xf32>
    %119 = vector.broadcast %98 : vector<1x32xf32> to vector<16x32xf32>
    %120 = arith.mulf %118, %119 : vector<16x32xf32>
    %121 = vector.broadcast %100 : vector<1x32xf32> to vector<16x32xf32>
    %122 = arith.addf %120, %121 : vector<16x32xf32>
    %123 = arith.truncf %122 : vector<16x32xf32> to vector<16x32xbf16>
    %c0_50 = arith.constant 0 : index
    %c0_51 = arith.constant 0 : index
    %c0_52 = arith.constant 0 : index
    %124 = vector.load %arg14[%c0_50, %c0_51, %c0_52] : memref<2x32x64xbf16, #tpu.memory_space<vmem>>, vector<1x32x64xbf16>
    %125 = vector.shape_cast %124 : vector<1x32x64xbf16> to vector<32x64xbf16>
    %cst_53 = arith.constant dense<0.000000e+00> : vector<16x64xf32>
    %126 = tpu.matmul %123, %125, %cst_53 {dimension_numbers = #tpu.dot_dimension_numbers<[1], [0], [0], [1], [0, 0, 1, 1], [], []>} : vector<16x32xbf16>, vector<32x64xbf16>, vector<16x64xf32> -> vector<16x64xf32>
    %c0_54 = arith.constant 0 : index
    %c0_55 = arith.constant 0 : index
    %c0_56 = arith.constant 0 : index
    %127 = vector.load %arg15[%c0_54, %c0_55, %c0_56] : memref<2x1x64xf32, #tpu.memory_space<vmem>>, vector<1x1x64xf32>
    %128 = vector.shape_cast %127 : vector<1x1x64xf32> to vector<1x64xf32>
    %129 = vector.broadcast %128 : vector<1x64xf32> to vector<16x64xf32>
    %130 = arith.addf %126, %129 : vector<16x64xf32>
    %cst_57 = arith.constant 5.000000e-01 : f32
    %131 = vector.broadcast %cst_57 : f32 to vector<16x64xf32>
    %132 = arith.mulf %131, %130 : vector<16x64xf32>
    %cst_58 = arith.constant 4.471500e-02 : f32
    %133 = vector.broadcast %cst_58 : f32 to vector<16x64xf32>
    %134 = arith.mulf %133, %130 : vector<16x64xf32>
    %135 = arith.mulf %134, %130 : vector<16x64xf32>
    %136 = arith.mulf %135, %130 : vector<16x64xf32>
    %137 = arith.addf %130, %136 : vector<16x64xf32>
    %cst_59 = arith.constant 0.797884583 : f32
    %138 = vector.broadcast %cst_59 : f32 to vector<16x64xf32>
    %139 = arith.mulf %138, %137 : vector<16x64xf32>
    %140 = math.tanh %139 : vector<16x64xf32>
    %cst_60 = arith.constant 1.000000e+00 : f32
    %141 = vector.broadcast %cst_60 : f32 to vector<16x64xf32>
    %142 = arith.addf %141, %140 : vector<16x64xf32>
    %143 = arith.mulf %132, %142 : vector<16x64xf32>
    %144 = arith.truncf %143 : vector<16x64xf32> to vector<16x64xbf16>
    %c0_61 = arith.constant 0 : index
    %c0_62 = arith.constant 0 : index
    %c0_63 = arith.constant 0 : index
    %145 = vector.load %arg16[%c0_61, %c0_62, %c0_63] : memref<2x64x32xbf16, #tpu.memory_space<vmem>>, vector<1x64x32xbf16>
    %146 = vector.shape_cast %145 : vector<1x64x32xbf16> to vector<64x32xbf16>
    %cst_64 = arith.constant dense<0.000000e+00> : vector<16x32xf32>
    %147 = tpu.matmul %144, %146, %cst_64 {dimension_numbers = #tpu.dot_dimension_numbers<[1], [0], [0], [1], [0, 0, 1, 1], [], []>} : vector<16x64xbf16>, vector<64x32xbf16>, vector<16x32xf32> -> vector<16x32xf32>
    %c0_65 = arith.constant 0 : index
    %c0_66 = arith.constant 0 : index
    %c0_67 = arith.constant 0 : index
    %148 = vector.load %arg17[%c0_65, %c0_66, %c0_67] : memref<2x1x32xf32, #tpu.memory_space<vmem>>, vector<1x1x32xf32>
    %149 = vector.shape_cast %148 : vector<1x1x32xf32> to vector<1x32xf32>
    %150 = vector.broadcast %149 : vector<1x32xf32> to vector<16x32xf32>
    %151 = arith.addf %147, %150 : vector<16x32xf32>
    %152 = arith.addf %151, %122 : vector<16x32xf32>
    %c0_68 = arith.constant 0 : index
    %c0_69 = arith.constant 0 : index
    %c0_70 = arith.constant 0 : index
    %153 = vector.load %arg18[%c0_68, %c0_69, %c0_70] : memref<2x1x32xf32, #tpu.memory_space<vmem>>, vector<1x1x32xf32>
    %154 = vector.shape_cast %153 : vector<1x1x32xf32> to vector<1x32xf32>
    %c0_71 = arith.constant 0 : index
    %c0_72 = arith.constant 0 : index
    %c0_73 = arith.constant 0 : index
    %155 = vector.load %arg19[%c0_71, %c0_72, %c0_73] : memref<2x1x32xf32, #tpu.memory_space<vmem>>, vector<1x1x32xf32>
    %156 = vector.shape_cast %155 : vector<1x1x32xf32> to vector<1x32xf32>
    %cst_74 = arith.constant dense<0.000000e+00> : vector<16xf32>
    %157 = vector.multi_reduction <add>, %152, %cst_74 [1] : vector<16x32xf32> to vector<16xf32>
    %158 = vector.shape_cast %157 : vector<16xf32> to vector<16x1xf32>
    %cst_75 = arith.constant 3.200000e+01 : f32
    %159 = vector.broadcast %cst_75 : f32 to vector<16x1xf32>
    %160 = arith.divf %158, %159 : vector<16x1xf32>
    %161 = arith.mulf %152, %152 : vector<16x32xf32>
    %cst_76 = arith.constant dense<0.000000e+00> : vector<16xf32>
    %162 = vector.multi_reduction <add>, %161, %cst_76 [1] : vector<16x32xf32> to vector<16xf32>
    %163 = vector.shape_cast %162 : vector<16xf32> to vector<16x1xf32>
    %cst_77 = arith.constant 3.200000e+01 : f32
    %164 = vector.broadcast %cst_77 : f32 to vector<16x1xf32>
    %165 = arith.divf %163, %164 : vector<16x1xf32>
    %166 = arith.mulf %160, %160 : vector<16x1xf32>
    %167 = arith.subf %165, %166 : vector<16x1xf32>
    %168 = vector.broadcast %160 : vector<16x1xf32> to vector<16x32xf32>
    %169 = arith.subf %152, %168 : vector<16x32xf32>
    %cst_78 = arith.constant 9.99999996E-13 : f32
    %170 = vector.broadcast %cst_78 : f32 to vector<16x1xf32>
    %171 = arith.addf %167, %170 : vector<16x1xf32>
    %172 = math.rsqrt %171 : vector<16x1xf32>
    %173 = vector.broadcast %172 : vector<16x1xf32> to vector<16x32xf32>
    %174 = arith.mulf %169, %173 : vector<16x32xf32>
    %175 = vector.broadcast %154 : vector<1x32xf32> to vector<16x32xf32>
    %176 = arith.mulf %174, %175 : vector<16x32xf32>
    %177 = vector.broadcast %156 : vector<1x32xf32> to vector<16x32xf32>
    %178 = arith.addf %176, %177 : vector<16x32xf32>
    %179 = arith.truncf %178 : vector<16x32xf32> to vector<16x32xbf16>
    %c1_79 = arith.constant 1 : index
    %c0_80 = arith.constant 0 : index
    %c0_81 = arith.constant 0 : index
    %180 = vector.load %arg8[%c1_79, %c0_80, %c0_81] : memref<2x32x96xbf16, #tpu.memory_space<vmem>>, vector<1x32x96xbf16>
    %181 = vector.shape_cast %180 : vector<1x32x96xbf16> to vector<32x96xbf16>
    %cst_82 = arith.constant dense<0.000000e+00> : vector<16x96xf32>
    %182 = tpu.matmul %179, %181, %cst_82 {dimension_numbers = #tpu.dot_dimension_numbers<[1], [0], [0], [1], [0, 0, 1, 1], [], []>} : vector<16x32xbf16>, vector<32x96xbf16>, vector<16x96xf32> -> vector<16x96xf32>
    %c1_83 = arith.constant 1 : index
    %c0_84 = arith.constant 0 : index
    %c0_85 = arith.constant 0 : index
    %183 = vector.load %arg9[%c1_83, %c0_84, %c0_85] : memref<2x1x96xf32, #tpu.memory_space<vmem>>, vector<1x1x96xf32>
    %184 = vector.shape_cast %183 : vector<1x1x96xf32> to vector<1x96xf32>
    %185 = vector.broadcast %184 : vector<1x96xf32> to vector<16x96xf32>
    %186 = arith.addf %182, %185 : vector<16x96xf32>
    %187 = vector.extract_strided_slice %186 {offsets = [0, 0], sizes = [16, 24], strides = [1, 1]} : vector<16x96xf32> to vector<16x24xf32>
    %188 = vector.extract_strided_slice %186 {offsets = [0, 24], sizes = [16, 24], strides = [1, 1]} : vector<16x96xf32> to vector<16x24xf32>
    %189 = vector.extract_strided_slice %186 {offsets = [0, 48], sizes = [16, 24], strides = [1, 1]} : vector<16x96xf32> to vector<16x24xf32>
    %190 = vector.extract_strided_slice %186 {offsets = [0, 72], sizes = [16, 24], strides = [1, 1]} : vector<16x96xf32> to vector<16x24xf32>
    %191 = tpu.concatenate %187, %188, %189, %190 in 0 : vector<16x24xf32>, vector<16x24xf32>, vector<16x24xf32>, vector<16x24xf32> -> vector<64x24xf32>
    %192 = vector.extract_strided_slice %191 {offsets = [0, 0], sizes = [64, 8], strides = [1, 1]} : vector<64x24xf32> to vector<64x8xf32>
    %193 = arith.truncf %192 : vector<64x8xf32> to vector<64x8xbf16>
    %194 = vector.extract_strided_slice %191 {offsets = [0, 8], sizes = [64, 8], strides = [1, 1]} : vector<64x24xf32> to vector<64x8xf32>
    %195 = arith.truncf %194 : vector<64x8xf32> to vector<64x8xbf16>
    %196 = vector.extract_strided_slice %191 {offsets = [0, 16], sizes = [64, 8], strides = [1, 1]} : vector<64x24xf32> to vector<64x8xf32>
    %197 = arith.truncf %196 : vector<64x8xf32> to vector<64x8xbf16>
    %cst_86 = arith.constant dense<0.000000e+00> : vector<64x64xf32>
    %198 = tpu.matmul %193, %195, %cst_86 {dimension_numbers = #tpu.dot_dimension_numbers<[1], [1], [0], [0], [0, 0, 1, 0], [], []>} : vector<64x8xbf16>, vector<64x8xbf16>, vector<64x64xf32> -> vector<64x64xf32>
    %199 = arith.addf %198, %49 : vector<64x64xf32>
    %cst_87 = arith.constant dense<0xFF800000> : vector<64xf32>
    %200 = vector.multi_reduction <maximumf>, %199, %cst_87 [1] : vector<64x64xf32> to vector<64xf32>
    %201 = vector.shape_cast %200 : vector<64xf32> to vector<64x1xf32>
    %202 = vector.broadcast %201 : vector<64x1xf32> to vector<64x64xf32>
    %203 = arith.subf %199, %202 : vector<64x64xf32>
    %204 = math.exp %203 : vector<64x64xf32>
    %cst_88 = arith.constant dense<0.000000e+00> : vector<64xf32>
    %205 = vector.multi_reduction <add>, %204, %cst_88 [1] : vector<64x64xf32> to vector<64xf32>
    %206 = vector.shape_cast %205 : vector<64xf32> to vector<64x1xf32>
    %207 = tpu.reciprocal %206 {approx = true} : vector<64x1xf32> -> vector<64x1xf32>
    %208 = vector.broadcast %207 : vector<64x1xf32> to vector<64x64xf32>
    %209 = arith.mulf %204, %208 : vector<64x64xf32>
    %210 = arith.truncf %209 : vector<64x64xf32> to vector<64x64xbf16>
    %cst_89 = arith.constant dense<0.000000e+00> : vector<64x8xf32>
    %211 = tpu.matmul %210, %197, %cst_89 {dimension_numbers = #tpu.dot_dimension_numbers<[1], [0], [0], [1], [0, 0, 1, 1], [], []>} : vector<64x64xbf16>, vector<64x8xbf16>, vector<64x8xf32> -> vector<64x8xf32>
    %212 = vector.extract_strided_slice %211 {offsets = [0, 0], sizes = [16, 8], strides = [1, 1]} : vector<64x8xf32> to vector<16x8xf32>
    %213 = vector.extract_strided_slice %211 {offsets = [16, 0], sizes = [16, 8], strides = [1, 1]} : vector<64x8xf32> to vector<16x8xf32>
    %214 = vector.extract_strided_slice %211 {offsets = [32, 0], sizes = [16, 8], strides = [1, 1]} : vector<64x8xf32> to vector<16x8xf32>
    %215 = vector.extract_strided_slice %211 {offsets = [48, 0], sizes = [16, 8], strides = [1, 1]} : vector<64x8xf32> to vector<16x8xf32>
    %216 = tpu.concatenate %212, %213, %214, %215 in 1 : vector<16x8xf32>, vector<16x8xf32>, vector<16x8xf32>, vector<16x8xf32> -> vector<16x32xf32>
    %217 = arith.truncf %216 : vector<16x32xf32> to vector<16x32xbf16>
    %c1_90 = arith.constant 1 : index
    %c0_91 = arith.constant 0 : index
    %c0_92 = arith.constant 0 : index
    %218 = vector.load %arg10[%c1_90, %c0_91, %c0_92] : memref<2x32x32xbf16, #tpu.memory_space<vmem>>, vector<1x32x32xbf16>
    %219 = vector.shape_cast %218 : vector<1x32x32xbf16> to vector<32x32xbf16>
    %cst_93 = arith.constant dense<0.000000e+00> : vector<16x32xf32>
    %220 = tpu.matmul %217, %219, %cst_93 {dimension_numbers = #tpu.dot_dimension_numbers<[1], [0], [0], [1], [0, 0, 1, 1], [], []>} : vector<16x32xbf16>, vector<32x32xbf16>, vector<16x32xf32> -> vector<16x32xf32>
    %c1_94 = arith.constant 1 : index
    %c0_95 = arith.constant 0 : index
    %c0_96 = arith.constant 0 : index
    %221 = vector.load %arg11[%c1_94, %c0_95, %c0_96] : memref<2x1x32xf32, #tpu.memory_space<vmem>>, vector<1x1x32xf32>
    %222 = vector.shape_cast %221 : vector<1x1x32xf32> to vector<1x32xf32>
    %223 = vector.broadcast %222 : vector<1x32xf32> to vector<16x32xf32>
    %224 = arith.addf %220, %223 : vector<16x32xf32>
    %225 = arith.addf %224, %178 : vector<16x32xf32>
    %c1_97 = arith.constant 1 : index
    %c0_98 = arith.constant 0 : index
    %c0_99 = arith.constant 0 : index
    %226 = vector.load %arg12[%c1_97, %c0_98, %c0_99] : memref<2x1x32xf32, #tpu.memory_space<vmem>>, vector<1x1x32xf32>
    %227 = vector.shape_cast %226 : vector<1x1x32xf32> to vector<1x32xf32>
    %c1_100 = arith.constant 1 : index
    %c0_101 = arith.constant 0 : index
    %c0_102 = arith.constant 0 : index
    %228 = vector.load %arg13[%c1_100, %c0_101, %c0_102] : memref<2x1x32xf32, #tpu.memory_space<vmem>>, vector<1x1x32xf32>
    %229 = vector.shape_cast %228 : vector<1x1x32xf32> to vector<1x32xf32>
    %cst_103 = arith.constant dense<0.000000e+00> : vector<16xf32>
    %230 = vector.multi_reduction <add>, %225, %cst_103 [1] : vector<16x32xf32> to vector<16xf32>
    %231 = vector.shape_cast %230 : vector<16xf32> to vector<16x1xf32>
    %cst_104 = arith.constant 3.200000e+01 : f32
    %232 = vector.broadcast %cst_104 : f32 to vector<16x1xf32>
    %233 = arith.divf %231, %232 : vector<16x1xf32>
    %234 = arith.mulf %225, %225 : vector<16x32xf32>
    %cst_105 = arith.constant dense<0.000000e+00> : vector<16xf32>
    %235 = vector.multi_reduction <add>, %234, %cst_105 [1] : vector<16x32xf32> to vector<16xf32>
    %236 = vector.shape_cast %235 : vector<16xf32> to vector<16x1xf32>
    %cst_106 = arith.constant 3.200000e+01 : f32
    %237 = vector.broadcast %cst_106 : f32 to vector<16x1xf32>
    %238 = arith.divf %236, %237 : vector<16x1xf32>
    %239 = arith.mulf %233, %233 : vector<16x1xf32>
    %240 = arith.subf %238, %239 : vector<16x1xf32>
    %241 = vector.broadcast %233 : vector<16x1xf32> to vector<16x32xf32>
    %242 = arith.subf %225, %241 : vector<16x32xf32>
    %cst_107 = arith.constant 9.99999996E-13 : f32
    %243 = vector.broadcast %cst_107 : f32 to vector<16x1xf32>
    %244 = arith.addf %240, %243 : vector<16x1xf32>
    %245 = math.rsqrt %244 : vector<16x1xf32>
    %246 = vector.broadcast %245 : vector<16x1xf32> to vector<16x32xf32>
    %247 = arith.mulf %242, %246 : vector<16x32xf32>
    %248 = vector.broadcast %227 : vector<1x32xf32> to vector<16x32xf32>
    %249 = arith.mulf %247, %248 : vector<16x32xf32>
    %250 = vector.broadcast %229 : vector<1x32xf32> to vector<16x32xf32>
    %251 = arith.addf %249, %250 : vector<16x32xf32>
    %252 = arith.truncf %251 : vector<16x32xf32> to vector<16x32xbf16>
    %c1_108 = arith.constant 1 : index
    %c0_109 = arith.constant 0 : index
    %c0_110 = arith.constant 0 : index
    %253 = vector.load %arg14[%c1_108, %c0_109, %c0_110] : memref<2x32x64xbf16, #tpu.memory_space<vmem>>, vector<1x32x64xbf16>
    %254 = vector.shape_cast %253 : vector<1x32x64xbf16> to vector<32x64xbf16>
    %cst_111 = arith.constant dense<0.000000e+00> : vector<16x64xf32>
    %255 = tpu.matmul %252, %254, %cst_111 {dimension_numbers = #tpu.dot_dimension_numbers<[1], [0], [0], [1], [0, 0, 1, 1], [], []>} : vector<16x32xbf16>, vector<32x64xbf16>, vector<16x64xf32> -> vector<16x64xf32>
    %c1_112 = arith.constant 1 : index
    %c0_113 = arith.constant 0 : index
    %c0_114 = arith.constant 0 : index
    %256 = vector.load %arg15[%c1_112, %c0_113, %c0_114] : memref<2x1x64xf32, #tpu.memory_space<vmem>>, vector<1x1x64xf32>
    %257 = vector.shape_cast %256 : vector<1x1x64xf32> to vector<1x64xf32>
    %258 = vector.broadcast %257 : vector<1x64xf32> to vector<16x64xf32>
    %259 = arith.addf %255, %258 : vector<16x64xf32>
    %cst_115 = arith.constant 5.000000e-01 : f32
    %260 = vector.broadcast %cst_115 : f32 to vector<16x64xf32>
    %261 = arith.mulf %260, %259 : vector<16x64xf32>
    %cst_116 = arith.constant 4.471500e-02 : f32
    %262 = vector.broadcast %cst_116 : f32 to vector<16x64xf32>
    %263 = arith.mulf %262, %259 : vector<16x64xf32>
    %264 = arith.mulf %263, %259 : vector<16x64xf32>
    %265 = arith.mulf %264, %259 : vector<16x64xf32>
    %266 = arith.addf %259, %265 : vector<16x64xf32>
    %cst_117 = arith.constant 0.797884583 : f32
    %267 = vector.broadcast %cst_117 : f32 to vector<16x64xf32>
    %268 = arith.mulf %267, %266 : vector<16x64xf32>
    %269 = math.tanh %268 : vector<16x64xf32>
    %cst_118 = arith.constant 1.000000e+00 : f32
    %270 = vector.broadcast %cst_118 : f32 to vector<16x64xf32>
    %271 = arith.addf %270, %269 : vector<16x64xf32>
    %272 = arith.mulf %261, %271 : vector<16x64xf32>
    %273 = arith.truncf %272 : vector<16x64xf32> to vector<16x64xbf16>
    %c1_119 = arith.constant 1 : index
    %c0_120 = arith.constant 0 : index
    %c0_121 = arith.constant 0 : index
    %274 = vector.load %arg16[%c1_119, %c0_120, %c0_121] : memref<2x64x32xbf16, #tpu.memory_space<vmem>>, vector<1x64x32xbf16>
    %275 = vector.shape_cast %274 : vector<1x64x32xbf16> to vector<64x32xbf16>
    %cst_122 = arith.constant dense<0.000000e+00> : vector<16x32xf32>
    %276 = tpu.matmul %273, %275, %cst_122 {dimension_numbers = #tpu.dot_dimension_numbers<[1], [0], [0], [1], [0, 0, 1, 1], [], []>} : vector<16x64xbf16>, vector<64x32xbf16>, vector<16x32xf32> -> vector<16x32xf32>
    %c1_123 = arith.constant 1 : index
    %c0_124 = arith.constant 0 : index
    %c0_125 = arith.constant 0 : index
    %277 = vector.load %arg17[%c1_123, %c0_124, %c0_125] : memref<2x1x32xf32, #tpu.memory_space<vmem>>, vector<1x1x32xf32>
    %278 = vector.shape_cast %277 : vector<1x1x32xf32> to vector<1x32xf32>
    %279 = vector.broadcast %278 : vector<1x32xf32> to vector<16x32xf32>
    %280 = arith.addf %276, %279 : vector<16x32xf32>
    %281 = arith.addf %280, %251 : vector<16x32xf32>
    %c1_126 = arith.constant 1 : index
    %c0_127 = arith.constant 0 : index
    %c0_128 = arith.constant 0 : index
    %282 = vector.load %arg18[%c1_126, %c0_127, %c0_128] : memref<2x1x32xf32, #tpu.memory_space<vmem>>, vector<1x1x32xf32>
    %283 = vector.shape_cast %282 : vector<1x1x32xf32> to vector<1x32xf32>
    %c1_129 = arith.constant 1 : index
    %c0_130 = arith.constant 0 : index
    %c0_131 = arith.constant 0 : index
    %284 = vector.load %arg19[%c1_129, %c0_130, %c0_131] : memref<2x1x32xf32, #tpu.memory_space<vmem>>, vector<1x1x32xf32>
    %285 = vector.shape_cast %284 : vector<1x1x32xf32> to vector<1x32xf32>
    %cst_132 = arith.constant dense<0.000000e+00> : vector<16xf32>
    %286 = vector.multi_reduction <add>, %281, %cst_132 [1] : vector<16x32xf32> to vector<16xf32>
    %287 = vector.shape_cast %286 : vector<16xf32> to vector<16x1xf32>
    %cst_133 = arith.constant 3.200000e+01 : f32
    %288 = vector.broadcast %cst_133 : f32 to vector<16x1xf32>
    %289 = arith.divf %287, %288 : vector<16x1xf32>
    %290 = arith.mulf %281, %281 : vector<16x32xf32>
    %cst_134 = arith.constant dense<0.000000e+00> : vector<16xf32>
    %291 = vector.multi_reduction <add>, %290, %cst_134 [1] : vector<16x32xf32> to vector<16xf32>
    %292 = vector.shape_cast %291 : vector<16xf32> to vector<16x1xf32>
    %cst_135 = arith.constant 3.200000e+01 : f32
    %293 = vector.broadcast %cst_135 : f32 to vector<16x1xf32>
    %294 = arith.divf %292, %293 : vector<16x1xf32>
    %295 = arith.mulf %289, %289 : vector<16x1xf32>
    %296 = arith.subf %294, %295 : vector<16x1xf32>
    %297 = vector.broadcast %289 : vector<16x1xf32> to vector<16x32xf32>
    %298 = arith.subf %281, %297 : vector<16x32xf32>
    %cst_136 = arith.constant 9.99999996E-13 : f32
    %299 = vector.broadcast %cst_136 : f32 to vector<16x1xf32>
    %300 = arith.addf %296, %299 : vector<16x1xf32>
    %301 = math.rsqrt %300 : vector<16x1xf32>
    %302 = vector.broadcast %301 : vector<16x1xf32> to vector<16x32xf32>
    %303 = arith.mulf %298, %302 : vector<16x32xf32>
    %304 = vector.broadcast %283 : vector<1x32xf32> to vector<16x32xf32>
    %305 = arith.mulf %303, %304 : vector<16x32xf32>
    %306 = vector.broadcast %285 : vector<1x32xf32> to vector<16x32xf32>
    %307 = arith.addf %305, %306 : vector<16x32xf32>
    %308 = vector.extract_strided_slice %307 {offsets = [0, 0], sizes = [1, 32], strides = [1, 1]} : vector<16x32xf32> to vector<1x32xf32>
    %309 = vector.extract_strided_slice %307 {offsets = [8, 0], sizes = [1, 32], strides = [1, 1]} : vector<16x32xf32> to vector<1x32xf32>
    %310 = tpu.concatenate %308, %309 in 0 : vector<1x32xf32>, vector<1x32xf32> -> vector<2x32xf32>
    %311 = arith.truncf %310 : vector<2x32xf32> to vector<2x32xbf16>
    %c0_137 = arith.constant 0 : index
    %c0_138 = arith.constant 0 : index
    %312 = vector.load %arg20[%c0_137, %c0_138] : memref<32x32xbf16, #tpu.memory_space<vmem>>, vector<32x32xbf16>
    %cst_139 = arith.constant dense<0.000000e+00> : vector<2x32xf32>
    %313 = tpu.matmul %311, %312, %cst_139 {dimension_numbers = #tpu.dot_dimension_numbers<[1], [0], [0], [1], [0, 0, 1, 1], [], []>} : vector<2x32xbf16>, vector<32x32xbf16>, vector<2x32xf32> -> vector<2x32xf32>
    %c0_140 = arith.constant 0 : index
    %c0_141 = arith.constant 0 : index
    %314 = vector.load %arg21[%c0_140, %c0_141] : memref<1x32xf32, #tpu.memory_space<vmem>>, vector<1x32xf32>
    %315 = vector.broadcast %314 : vector<1x32xf32> to vector<2x32xf32>
    %316 = arith.addf %313, %315 : vector<2x32xf32>
    %317 = math.tanh %316 : vector<2x32xf32>
    %c0_142 = arith.constant 0 : index
    %c0_143 = arith.constant 0 : index
    %318 = vector.load %arg22[%c0_142, %c0_143] : memref<1x32xf32, #tpu.memory_space<vmem>>, vector<1x32xf32>
    %319 = vector.broadcast %318 : vector<1x32xf32> to vector<2x32xf32>
    %320 = arith.mulf %317, %319 : vector<2x32xf32>
    %cst_144 = arith.constant dense<0.000000e+00> : vector<2xf32>
    %321 = vector.multi_reduction <add>, %320, %cst_144 [1] : vector<2x32xf32> to vector<2xf32>
    %322 = vector.shape_cast %321 : vector<2xf32> to vector<2x1xf32>
    %c0_145 = arith.constant 0 : index
    %c0_146 = arith.constant 0 : index
    %323 = vector.load %arg23[%c0_145, %c0_146] : memref<1x1xf32, #tpu.memory_space<vmem>>, vector<1x1xf32>
    %324 = vector.broadcast %323 : vector<1x1xf32> to vector<2x1xf32>
    %325 = arith.addf %322, %324 : vector<2x1xf32>
    %c0_147 = arith.constant 0 : index
    %c0_148 = arith.constant 0 : index
    %326 = vector.load %arg24[%c0_147, %c0_148] : memref<2x1xf32, #tpu.memory_space<vmem>>, vector<2x1xf32>
    tpu.vector_store %arg24[%c0_147, %c0_148], %325 {strides = array<i32>} : memref<2x1xf32, #tpu.memory_space<vmem>>, vector<2x1xf32>,
    return
  }
}

</mosaic_0001>

<llo_original>
// kernel: bert_classifier_forward.1
$region0: #{bert_classifier_forward.1}
  #allocation0 [shape = 'u32[]', space=smem, size = 0x4, offset = 0x4, fixed_abs, tag = 'smem constant byte address 0x4 - core index']
  #allocation1 [shape = 'u32[144,128]{1,0:T(1,128)}', space=vmem, size = 0x12000, scoped, tag = 'internal scratch']
  #allocation2 [shape = 'f32[1,1]{1,0:T(1,128)S(1)}', space=vmem, size = 0x200, scoped, tag = 'scoped memory for bert_classifier_forward.1']
  %s0 = inlined_call_operand.vmem [shape: s32[16,1], index: 0, kind: input, shape index: {}]
  %s1 = inlined_call_operand.vmem [shape: s32[16,1], index: 1, kind: input, shape index: {}]
  %s2 = inlined_call_operand.vmem [shape: f32[64,64], index: 2, kind: input, shape index: {}]
  %s3 = inlined_call_operand.vmem [shape: bf16[100,32], index: 3, kind: input, shape index: {}]
  %s4 = inlined_call_operand.vmem [shape: f32[32,32], index: 4, kind: input, shape index: {}]
  %s5 = inlined_call_operand.vmem [shape: f32[2,32], index: 5, kind: input, shape index: {}]
  %s6 = inlined_call_operand.vmem [shape: f32[1,32], index: 6, kind: input, shape index: {}]
  %s7 = inlined_call_operand.vmem [shape: f32[1,32], index: 7, kind: input, shape index: {}]
  %s8 = inlined_call_operand.vmem [shape: bf16[2,32,96], index: 8, kind: input, shape index: {}]
  %s9 = inlined_call_operand.vmem [shape: f32[2,1,96], index: 9, kind: input, shape index: {}]
  %s10 = inlined_call_operand.vmem [shape: bf16[2,32,32], index: 10, kind: input, shape index: {}]
  %s11 = inlined_call_operand.vmem [shape: f32[2,1,32], index: 11, kind: input, shape index: {}]
  %s12 = inlined_call_operand.vmem [shape: f32[2,1,32], index: 12, kind: input, shape index: {}]
  %s13 = inlined_call_operand.vmem [shape: f32[2,1,32], index: 13, kind: input, shape index: {}]
  %s14 = inlined_call_operand.vmem [shape: bf16[2,32,64], index: 14, kind: input, shape index: {}]
  %s15 = inlined_call_operand.vmem [shape: f32[2,1,64], index: 15, kind: input, shape index: {}]
  %s16 = inlined_call_operand.vmem [shape: bf16[2,64,32], index: 16, kind: input, shape index: {}]
  %s17 = inlined_call_operand.vmem [shape: f32[2,1,32], index: 17, kind: input, shape index: {}]
  %s18 = inlined_call_operand.vmem [shape: f32[2,1,32], index: 18, kind: input, shape index: {}]
  %s19 = inlined_call_operand.vmem [shape: f32[2,1,32], index: 19, kind: input, shape index: {}]
  %s20 = inlined_call_operand.vmem [shape: bf16[32,32], index: 20, kind: input, shape index: {}]
  %s21 = inlined_call_operand.vmem [shape: f32[1,32], index: 21, kind: input, shape index: {}]
  %s22 = inlined_call_operand.vmem [shape: f32[1,32], index: 22, kind: input, shape index: {}]
  %s23 = inlined_call_operand.<no memory space> [shape: f32[1,1], index: 23, kind: input, shape index: {}]
  %s24 = inlined_call_operand.vmem [shape: f32[2,1], index: 24, kind: output, shape index: {}]
  %s25 = sld [smem:[#allocation0]]
  $region106: #{bert_classifier_forward.1} parent=0
    _
  %s27 = ssub.s32 1, %s25
  %s28 = scalar_select 0, %s27, %s25
  %v29 = vstv %s23
  %30 = vst [vmem:[#allocation2] sm:$0x1] %v29
  // Predicated region
  $region2: #{bert_classifier_forward.1} parent=0 // pred_check
    _
  $region3: #{bert_classifier_forward.1} parent=0 // pred_check_branch
    %32 = sbr.rel (0) target = $region5
  $region4: #{bert_classifier_forward.1} parent=0 // pred_region
    _
  $region5: #{bert_classifier_forward.1} parent=0 // pred_fallthru
    _
  // Predicated region
  $region6: #{bert_classifier_forward.1} parent=0 // pred_check
    _
  $region7: #{bert_classifier_forward.1} parent=0 // pred_check_branch
    %34 = sbr.rel (0) target = $region9
  $region8: #{bert_classifier_forward.1} parent=0 // pred_region
    _
  $region9: #{bert_classifier_forward.1} parent=0 // pred_fallthru
    _
  // Predicated region
  $region10: #{bert_classifier_forward.1} parent=0 // pred_check
    _
  $region11: #{bert_classifier_forward.1} parent=0 // pred_check_branch
    %36 = sbr.rel (0) target = $region13
  $region12: #{bert_classifier_forward.1} parent=0 // pred_region
    _
  $region13: #{bert_classifier_forward.1} parent=0 // pred_fallthru
    _
  // Predicated region
  $region14: #{bert_classifier_forward.1} parent=0 // pred_check
    _
  $region15: #{bert_classifier_forward.1} parent=0 // pred_check_branch
    %38 = sbr.rel (0) target = $region17
  $region16: #{bert_classifier_forward.1} parent=0 // pred_region
    _
  $region17: #{bert_classifier_forward.1} parent=0 // pred_fallthru
    _
  // Predicated region
  $region18: #{bert_classifier_forward.1} parent=0 // pred_check
    _
  $region19: #{bert_classifier_forward.1} parent=0 // pred_check_branch
    %40 = sbr.rel (0) target = $region21
  $region20: #{bert_classifier_forward.1} parent=0 // pred_region
    _
  $region21: #{bert_classifier_forward.1} parent=0 // pred_fallthru
    _
  // Predicated region
  $region22: #{bert_classifier_forward.1} parent=0 // pred_check
    _
  $region23: #{bert_classifier_forward.1} parent=0 // pred_check_branch
    %42 = sbr.rel (0) target = $region25
  $region24: #{bert_classifier_forward.1} parent=0 // pred_region
    _
  $region25: #{bert_classifier_forward.1} parent=0 // pred_fallthru
    _
  // Predicated region
  $region26: #{bert_classifier_forward.1} parent=0 // pred_check
    _
  $region27: #{bert_classifier_forward.1} parent=0 // pred_check_branch
    %44 = sbr.rel (0) target = $region29
  $region28: #{bert_classifier_forward.1} parent=0 // pred_region
    _
  $region29: #{bert_classifier_forward.1} parent=0 // pred_fallthru
    _
  // Predicated region
  $region30: #{bert_classifier_forward.1} parent=0 // pred_check
    _
  $region31: #{bert_classifier_forward.1} parent=0 // pred_check_branch
    %46 = sbr.rel (0) target = $region33
  $region32: #{bert_classifier_forward.1} parent=0 // pred_region
    _
  $region33: #{bert_classifier_forward.1} parent=0 // pred_fallthru
    _
  // Predicated region
  $region34: #{bert_classifier_forward.1} parent=0 // pred_check
    _
  $region35: #{bert_classifier_forward.1} parent=0 // pred_check_branch
    %48 = sbr.rel (0) target = $region37
  $region36: #{bert_classifier_forward.1} parent=0 // pred_region
    _
  $region37: #{bert_classifier_forward.1} parent=0 // pred_fallthru
    _
  // Predicated region
  $region38: #{bert_classifier_forward.1} parent=0 // pred_check
    _
  $region39: #{bert_classifier_forward.1} parent=0 // pred_check_branch
    %50 = sbr.rel (0) target = $region41
  $region40: #{bert_classifier_forward.1} parent=0 // pred_region
    _
  $region41: #{bert_classifier_forward.1} parent=0 // pred_fallthru
    _
  // Predicated region
  $region42: #{bert_classifier_forward.1} parent=0 // pred_check
    _
  $region43: #{bert_classifier_forward.1} parent=0 // pred_check_branch
    %52 = sbr.rel (0) target = $region45
  $region44: #{bert_classifier_forward.1} parent=0 // pred_region
    _
  $region45: #{bert_classifier_forward.1} parent=0 // pred_fallthru
    _
  // Predicated region
  $region46: #{bert_classifier_forward.1} parent=0 // pred_check
    _
  $region47: #{bert_classifier_forward.1} parent=0 // pred_check_branch
    %54 = sbr.rel (0) target = $region49
  $region48: #{bert_classifier_forward.1} parent=0 // pred_region
    _
  $region49: #{bert_classifier_forward.1} parent=0 // pred_fallthru
    _
  // Predicated region
  $region50: #{bert_classifier_forward.1} parent=0 // pred_check
    _
  $region51: #{bert_classifier_forward.1} parent=0 // pred_check_branch
    %56 = sbr.rel (0) target = $region53
  $region52: #{bert_classifier_forward.1} parent=0 // pred_region
    _
  $region53: #{bert_classifier_forward.1} parent=0 // pred_fallthru
    _
  // Predicated region
  $region54: #{bert_classifier_forward.1} parent=0 // pred_check
    _
  $region55: #{bert_classifier_forward.1} parent=0 // pred_check_branch
    %58 = sbr.rel (0) target = $region57
  $region56: #{bert_classifier_forward.1} parent=0 // pred_region
    _
  $region57: #{bert_classifier_forward.1} parent=0 // pred_fallthru
    _
  // Predicated region
  $region58: #{bert_classifier_forward.1} parent=0 // pred_check
    _
  $region59: #{bert_classifier_forward.1} parent=0 // pred_check_branch
    %60 = sbr.rel (0) target = $region61
  $region60: #{bert_classifier_forward.1} parent=0 // pred_region
    _
  $region61: #{bert_classifier_forward.1} parent=0 // pred_fallthru
    _
  // Predicated region
  $region62: #{bert_classifier_forward.1} parent=0 // pred_check
    _
  $region63: #{bert_classifier_forward.1} parent=0 // pred_check_branch
    %62 = sbr.rel (0) target = $region65
  $region64: #{bert_classifier_forward.1} parent=0 // pred_region
    _
  $region65: #{bert_classifier_forward.1} parent=0 // pred_fallthru
    _
  // Predicated region
  $region66: #{bert_classifier_forward.1} parent=0 // pred_check
    _
  $region67: #{bert_classifier_forward.1} parent=0 // pred_check_branch
    %64 = sbr.rel (0) target = $region69
  $region68: #{bert_classifier_forward.1} parent=0 // pred_region
    _
  $region69: #{bert_classifier_forward.1} parent=0 // pred_fallthru
    _
  // Predicated region
  $region70: #{bert_classifier_forward.1} parent=0 // pred_check
    _
  $region71: #{bert_classifier_forward.1} parent=0 // pred_check_branch
    %66 = sbr.rel (0) target = $region73
  $region72: #{bert_classifier_forward.1} parent=0 // pred_region
    _
  $region73: #{bert_classifier_forward.1} parent=0 // pred_fallthru
    _
  // Predicated region
  $region74: #{bert_classifier_forward.1} parent=0 // pred_check
    _
  $region75: #{bert_classifier_forward.1} parent=0 // pred_check_branch
    %68 = sbr.rel (0) target = $region77
  $region76: #{bert_classifier_forward.1} parent=0 // pred_region
    _
  $region77: #{bert_classifier_forward.1} parent=0 // pred_fallthru
    _
  // Predicated region
  $region78: #{bert_classifier_forward.1} parent=0 // pred_check
    _
  $region79: #{bert_classifier_forward.1} parent=0 // pred_check_branch
    %70 = sbr.rel (0) target = $region81
  $region80: #{bert_classifier_forward.1} parent=0 // pred_region
    _
  $region81: #{bert_classifier_forward.1} parent=0 // pred_fallthru
    _
  // Predicated region
  $region82: #{bert_classifier_forward.1} parent=0 // pred_check
    _
  $region83: #{bert_classifier_forward.1} parent=0 // pred_check_branch
    %72 = sbr.rel (0) target = $region85
  $region84: #{bert_classifier_forward.1} parent=0 // pred_region
    _
  $region85: #{bert_classifier_forward.1} parent=0 // pred_fallthru
    _
  // Predicated region
  $region86: #{bert_classifier_forward.1} parent=0 // pred_check
    _
  $region87: #{bert_classifier_forward.1} parent=0 // pred_check_branch
    %74 = sbr.rel (0) target = $region89
  $region88: #{bert_classifier_forward.1} parent=0 // pred_region
    _
  $region89: #{bert_classifier_forward.1} parent=0 // pred_fallthru
    _
  // Predicated region
  $region90: #{bert_classifier_forward.1} parent=0 // pred_check
    _
  $region91: #{bert_classifier_forward.1} parent=0 // pred_check_branch
    %76 = sbr.rel (0) target = $region93
  $region92: #{bert_classifier_forward.1} parent=0 // pred_region
    _
  $region93: #{bert_classifier_forward.1} parent=0 // pred_fallthru
    _
  // Predicated region
  $region94: #{bert_classifier_forward.1} parent=0 // pred_check
    _
  $region95: #{bert_classifier_forward.1} parent=0 // pred_check_branch
    %78 = sbr.rel (0) target = $region97
  $region96: #{bert_classifier_forward.1} parent=0 // pred_region
    _
  $region97: #{bert_classifier_forward.1} parent=0 // pred_fallthru
    _
  %v80 = vld [vmem:[%s0] sm:$0xff]
  %v81 = vld [vmem:[%s0 + $0x8] sm:$0xff]
  %v82 = vld [vmem:[%s1] sm:$0xff]
  %v83 = vld [vmem:[%s1 + $0x8] sm:$0xff]
  %v84 = vlaneseq
  %v85 = vand.u32 %v84, 127
  %86 = vset.pattern.permute.xlu0 0
  %87 = vperm.xlu0 %86, %v80
  %v88 = vpop.permute.xlu0 %87
  %89 = vset.pattern.permute.xlu0 0
  %90 = vperm.xlu0 %89, %v81
  %v91 = vpop.permute.xlu0 %90
  %vm92 = vcmp.eq.s32.totalorder %v88, %v85
  %vm93 = vcmp.eq.s32.totalorder %v91, %v85
  %v94 = vsel %vm92, 1, 0
  %v95 = vsel %vm93, 1, 0
  %v96 = vcvt.s32.f32 %v94
  %v97 = vcvt.s32.f32 %v95
  %v98 = vpack.c.bf16 %v97, %v96
  %v99 = vld [vmem:[%s3] sm:$0xf]
  %v100 = vld [vmem:[%s3 + $0x4] sm:$0xf]
  %v101 = vld [vmem:[%s3 + $0x8] sm:$0xf]
  %v102 = vld [vmem:[%s3 + $0xc] sm:$0xf]
  %v103 = vld [vmem:[%s3 + $0x10] sm:$0xf]
  %v104 = vld [vmem:[%s3 + $0x14] sm:$0xf]
  %v105 = vld [vmem:[%s3 + $0x18] sm:$0xf]
  %v106 = vld [vmem:[%s3 + $0x1c] sm:$0xf]
  %v107 = vld [vmem:[%s3 + $0x20] sm:$0xf]
  %v108 = vld [vmem:[%s3 + $0x24] sm:$0xf]
  %v109 = vld [vmem:[%s3 + $0x28] sm:$0xf]
  %v110 = vld [vmem:[%s3 + $0x2c] sm:$0xf]
  %v111 = vld [vmem:[%s3 + $0x30] sm:$0x3]
  %v112 = vld [vmem:[%s4] sm:$0xff]
  %vm113 = vcmp.eq.s32.totalorder %v82, 0
  %vm114 = vcmp.eq.s32.totalorder %v83, 0
  %v115 = vld [vmem:[%s5] sm:$0x1]
  %v116 = vld [vmem:[%s5 + $0x1] sm:$0x1]
  %v117 = vsel %vm113, 1, 0
  %v118 = vsel %vm114, 1, 0
  %119 = vset.pattern.permute.xlu0 0
  %120 = vperm.xlu0 %119, %v117
  %v121 = vpop.permute.xlu0 %120
  %122 = vset.pattern.permute.xlu0 0
  %123 = vperm.xlu0 %122, %v118
  %v124 = vpop.permute.xlu0 %123
  %vm125 = vcmp.eq.s32.totalorder %v121, 1
  %vm126 = vcmp.eq.s32.totalorder %v124, 1
  %v127 = vlaneseq
  %v128 = vshrl.u32 %v127, 7
  %v129 = vsub.s32 0, %v128
  %v130 = vrot.slane %v115, %v129
  %v131 = vlaneseq
  %v132 = vshrl.u32 %v131, 7
  %v133 = vsub.s32 0, %v132
  %v134 = vrot.slane %v116, %v133
  %v135 = vsel %vm125, %v130, %v134
  %v136 = vsel %vm126, %v130, %v134
  %v150 = vunpack.c.l.b16 %v99
  %v151 = vunpack.c.l.b16 %v100
  %v152 = vunpack.c.l.b16 %v101
  %v153 = vunpack.c.l.b16 %v102
  %v154 = vunpack.c.l.b16 %v103
  %v155 = vunpack.c.l.b16 %v104
  %v156 = vunpack.c.l.b16 %v105
  %v157 = vunpack.c.l.b16 %v106
  %v158 = vunpack.c.l.b16 %v107
  %v159 = vunpack.c.l.b16 %v108
  %v160 = vunpack.c.l.b16 %v109
  %v161 = vunpack.c.l.b16 %v110
  %v162 = vunpack.c.l.b16 %v111
  %v163 = vpack.c.b16 %v151, %v150
  %v164 = vpack.c.b16 %v153, %v152
  %v165 = vpack.c.b16 %v155, %v154
  %v166 = vpack.c.b16 %v157, %v156
  %v167 = vpack.c.b16 %v159, %v158
  %v168 = vpack.c.b16 %v161, %v160
  %v169 = vpack.c.b16 %v162, %v162
  %vm176 = vcmask 818176
  %v178 = vsel %vm176, %v98, 0
  %vm180 = vcmask 1041408
  %v182 = vsel %vm180, %v169, 0
  %184 = vmatprep.subr.bf16.mxu0 0
  %185 = vmatpush1.bf16.msra.mxu0 0
  %186 = vmatprep.subr.bf16.mxu0 0
  %187 = vmatpush1.bf16.msra.mxu0 %v182
  %188 = vmatprep.subr.bf16.mxu0 0
  %189 = vmatpush1.bf16.msra.mxu0 %v168
  %190 = vmatprep.subr.bf16.mxu0 0
  %191 = vmatpush1.bf16.msra.mxu0 %v167
  %192 = vmatprep.subr.bf16.mxu0 0
  %193 = vmatpush1.bf16.msra.mxu0 %v166
  %194 = vmatprep.subr.bf16.mxu0 0
  %195 = vmatpush1.bf16.msra.mxu0 %v165
  %196 = vmatprep.subr.bf16.mxu0 0
  %197 = vmatpush1.bf16.msra.mxu0 %v164
  %198 = vmatprep.subr.bf16.mxu0 0
  %199 = vmatpush1.bf16.msra.mxu0 %v163
  %200 = vmatprep.subr.bf16.mxu0 0
  %201 = vmatpush2.bf16.msra.mxu0 0
  %202 = vmatprep.subr.bf16.mxu0 0
  %203 = vmatpush2.bf16.msra.mxu0 0
  %204 = vmatprep.subr.bf16.mxu0 0
  %205 = vmatpush2.bf16.msra.mxu0 0
  %206 = vmatprep.subr.bf16.mxu0 0
  %207 = vmatpush2.bf16.msra.mxu0 0
  %208 = vmatprep.subr.bf16.mxu0 0
  %209 = vmatpush2.bf16.msra.mxu0 0
  %210 = vmatprep.subr.bf16.mxu0 0
  %211 = vmatpush2.bf16.msra.mxu0 0
  %212 = vmatprep.subr.bf16.mxu0 0
  %213 = vmatpush2.bf16.msra.mxu0 0
  %214 = vmatprep.subr.bf16.mxu0 0
  %215 = vmatpush2.bf16.msra.mxu0 0
  %216 = vmatprep.mubr.bf16.mxu0 0
  %217 = vmatmul.mubr.bf16.gmra.mxu0 %v178
  %v218 = vpop.f32.mrf.mxu0
  %v219 = vadd.f32 %v112, %v218
  %v220 = vpop.f32.mrf.mxu0
  %v221 = vpop.f32.mrf.mxu0
  %v222 = vadd.f32 %v112, %v221
  %v223 = vpop.f32.mrf.mxu0
  %224 = vdwg.mxu0
  %v225 = vadd.f32 %v219, %v135
  %v226 = vadd.f32 %v222, %v136
  %v227 = vld [vmem:[%s6] sm:$0x1]
  %v228 = vld [vmem:[%s7] sm:$0x1]
  %vm229 = vcmask 261120
  %v230 = vsel %vm229, %v225, 0.0
  %231 = vadd.xlane.f32.xlu0 %v230
  %v232 = vpop.xlane.xlu0 %231
  %v233 = vsel %vm229, %v226, 0.0
  %234 = vadd.xlane.f32.xlu0 %v233
  %v235 = vpop.xlane.xlu0 %234
  %v236 = vrcp.pop 32.0
  %v237 = vmul.f32 %v232, %v236
  %v238 = vmul.f32 %v235, %v236
  %v239 = vmul.f32 %v225, %v225
  %v240 = vmul.f32 %v226, %v226
  %v241 = vsel %vm229, %v239, 0.0
  %242 = vadd.xlane.f32.xlu0 %v241
  %v243 = vpop.xlane.xlu0 %242
  %v244 = vsel %vm229, %v240, 0.0
  %245 = vadd.xlane.f32.xlu0 %v244
  %v246 = vpop.xlane.xlu0 %245
  %v247 = vmul.f32 %v243, %v236
  %v248 = vmul.f32 %v246, %v236
  %v249 = vmul.f32 %v237, %v237
  %v250 = vmul.f32 %v238, %v238
  %v251 = vsub.f32 %v247, %v249
  %v252 = vsub.f32 %v248, %v250
  %v253 = vsub.f32 %v225, %v237
  %v254 = vsub.f32 %v226, %v238
  %v255 = vadd.f32 %v251, 1e-12
  %v256 = vadd.f32 %v252, 1e-12
  %v257 = vrsqrt.pop %v255
  %v258 = vrsqrt.pop %v256
  %v259 = vmul.f32 %v253, %v257
  %v260 = vmul.f32 %v254, %v258
  %v262 = vlaneseq
  %v263 = vshrl.u32 %v262, 7
  %v264 = vsub.s32 0, %v263
  %v265 = vrot.slane %v227, %v264
  %v267 = vmul.f32 %v259, %v265
  %v268 = vmul.f32 %v260, %v265
  %v270 = vlaneseq
  %v271 = vshrl.u32 %v270, 7
  %v272 = vsub.s32 0, %v271
  %v273 = vrot.slane %v228, %v272
  %v275 = vadd.f32 %v267, %v273
  %v276 = vadd.f32 %v268, %v273
  %v277 = vld [vmem:[%s2] sm:$0xff]
  %v278 = vld [vmem:[%s2 + $0x8] sm:$0xff]
  %v279 = vld [vmem:[%s2 + $0x10] sm:$0xff]
  %v280 = vld [vmem:[%s2 + $0x18] sm:$0xff]
  %v281 = vld [vmem:[%s2 + $0x20] sm:$0xff]
  %v282 = vld [vmem:[%s2 + $0x28] sm:$0xff]
  %v283 = vld [vmem:[%s2 + $0x30] sm:$0xff]
  %v284 = vld [vmem:[%s2 + $0x38] sm:$0xff]
  %v285 = vpack.c.bf16 %v276, %v275
  %v286 = vld [vmem:[%s8] sm:$0xf]
  %v287 = vld [vmem:[%s8 + $0x4] sm:$0xf]
  %v288 = vld [vmem:[%s8 + $0x8] sm:$0xf]
  %v289 = vld [vmem:[%s8 + $0xc] sm:$0xf]
  %v290 = vld [vmem:[%s9] sm:$0x1]
  %v292 = vlaneseq
  %v293 = vshrl.u32 %v292, 7
  %v294 = vsub.s32 0, %v293
  %v295 = vrot.slane %v290, %v294
  %v301 = vunpack.c.l.b16 %v286
  %v302 = vunpack.c.l.b16 %v287
  %v303 = vunpack.c.l.b16 %v288
  %v304 = vunpack.c.l.b16 %v289
  %v305 = vpack.c.b16 %v302, %v301
  %v306 = vpack.c.b16 %v304, %v303
  %v310 = vsel %vm229, %v285, 0
  %312 = vmatprep.subr.bf16.mxu0 0
  %313 = vmatpush1.bf16.msra.mxu0 0
  %314 = vmatprep.subr.bf16.mxu0 0
  %315 = vmatpush1.bf16.msra.mxu0 0
  %316 = vmatprep.subr.bf16.mxu0 0
  %317 = vmatpush1.bf16.msra.mxu0 0
  %318 = vmatprep.subr.bf16.mxu0 0
  %319 = vmatpush1.bf16.msra.mxu0 0
  %320 = vmatprep.subr.bf16.mxu0 0
  %321 = vmatpush1.bf16.msra.mxu0 0
  %322 = vmatprep.subr.bf16.mxu0 0
  %323 = vmatpush1.bf16.msra.mxu0 0
  %324 = vmatprep.subr.bf16.mxu0 0
  %325 = vmatpush1.bf16.msra.mxu0 %v306
  %326 = vmatprep.subr.bf16.mxu0 0
  %327 = vmatpush1.bf16.msra.mxu0 %v305
  %328 = vmatprep.subr.bf16.mxu0 0
  %329 = vmatpush2.bf16.msra.mxu0 0
  %330 = vmatprep.subr.bf16.mxu0 0
  %331 = vmatpush2.bf16.msra.mxu0 0
  %332 = vmatprep.subr.bf16.mxu0 0
  %333 = vmatpush2.bf16.msra.mxu0 0
  %334 = vmatprep.subr.bf16.mxu0 0
  %335 = vmatpush2.bf16.msra.mxu0 0
  %336 = vmatprep.subr.bf16.mxu0 0
  %337 = vmatpush2.bf16.msra.mxu0 0
  %338 = vmatprep.subr.bf16.mxu0 0
  %339 = vmatpush2.bf16.msra.mxu0 0
  %340 = vmatprep.subr.bf16.mxu0 0
  %341 = vmatpush2.bf16.msra.mxu0 0
  %342 = vmatprep.subr.bf16.mxu0 0
  %343 = vmatpush2.bf16.msra.mxu0 0
  %344 = vmatprep.mubr.bf16.mxu0 0
  %345 = vmatmul.mubr.bf16.gmra.mxu0 %v310
  %v346 = vpop.f32.mrf.mxu0
  %v347 = vadd.f32 %v295, %v346
  %v348 = vpop.f32.mrf.mxu0
  %v349 = vpop.f32.mrf.mxu0
  %v350 = vadd.f32 %v295, %v349
  %v351 = vpop.f32.mrf.mxu0
  %352 = vdwg.mxu0
  %355 = vrot.lane.b32.xlu0 %v347, 104
  %v356 = vpop.permute.xlu0 %355
  %357 = vrot.lane.b32.xlu0 %v350, 104
  %v358 = vpop.permute.xlu0 %357
  %361 = vrot.lane.b32.xlu0 %v347, 80
  %v362 = vpop.permute.xlu0 %361
  %363 = vrot.lane.b32.xlu0 %v350, 80
  %v364 = vpop.permute.xlu0 %363
  %367 = vrot.lane.b32.xlu0 %v347, 56
  %v368 = vpop.permute.xlu0 %367
  %369 = vrot.lane.b32.xlu0 %v350, 56
  %v370 = vpop.permute.xlu0 %369
  %v373 = vpack.c.bf16 %v350, %v347
  %v374 = vpack.c.bf16 %v358, %v356
  %v375 = vpack.c.bf16 %v364, %v362
  %v376 = vpack.c.bf16 %v370, %v368
  %381 = vrot.lane.b32.xlu0 %v373, 120
  %v382 = vpop.permute.xlu0 %381
  %383 = vrot.lane.b32.xlu0 %v374, 120
  %v384 = vpop.permute.xlu0 %383
  %385 = vrot.lane.b32.xlu0 %v375, 120
  %v386 = vpop.permute.xlu0 %385
  %387 = vrot.lane.b32.xlu0 %v376, 120
  %v388 = vpop.permute.xlu0 %387
  %vm389 = vcmask 64512
  %v391 = vsel %vm389, %v373, 0
  %v394 = vsel %vm389, %v374, 0
  %v397 = vsel %vm389, %v375, 0
  %v400 = vsel %vm389, %v376, 0
  %v403 = vsel %vm389, %v382, 0
  %v406 = vsel %vm389, %v384, 0
  %v409 = vsel %vm389, %v386, 0
  %v412 = vsel %vm389, %v388, 0
  %414 = vmatprep.subr.bf16.mxu0 0
  %415 = vmatpush1.bf16.xpose.msra.mxu0 0
  %416 = vmatprep.subr.bf16.mxu0 0
  %417 = vmatpush1.bf16.xpose.msra.mxu0 0
  %418 = vmatprep.subr.bf16.mxu0 0
  %419 = vmatpush1.bf16.xpose.msra.mxu0 0
  %420 = vmatprep.subr.bf16.mxu0 0
  %421 = vmatpush1.bf16.xpose.msra.mxu0 0
  %422 = vmatprep.subr.bf16.mxu0 0
  %423 = vmatpush1.bf16.xpose.msra.mxu0 %v412
  %424 = vmatprep.subr.bf16.mxu0 0
  %425 = vmatpush1.bf16.xpose.msra.mxu0 %v409
  %426 = vmatprep.subr.bf16.mxu0 0
  %427 = vmatpush1.bf16.xpose.msra.mxu0 %v406
  %428 = vmatprep.subr.bf16.mxu0 0
  %429 = vmatpush1.bf16.xpose.msra.mxu0 %v403
  %430 = vmatprep.subr.bf16.mxu0 0
  %431 = vmatpush2.bf16.xpose.msra.mxu0 0
  %432 = vmatprep.subr.bf16.mxu0 0
  %433 = vmatpush2.bf16.xpose.msra.mxu0 0
  %434 = vmatprep.subr.bf16.mxu0 0
  %435 = vmatpush2.bf16.xpose.msra.mxu0 0
  %436 = vmatprep.subr.bf16.mxu0 0
  %437 = vmatpush2.bf16.xpose.msra.mxu0 0
  %438 = vmatprep.subr.bf16.mxu0 0
  %439 = vmatpush2.bf16.xpose.msra.mxu0 0
  %440 = vmatprep.subr.bf16.mxu0 0
  %441 = vmatpush2.bf16.xpose.msra.mxu0 0
  %442 = vmatprep.subr.bf16.mxu0 0
  %443 = vmatpush2.bf16.xpose.msra.mxu0 0
  %444 = vmatprep.subr.bf16.mxu0 0
  %445 = vmatpush2.bf16.xpose.msra.mxu0 0
  %446 = vmatprep.mubr.bf16.mxu0 0
  %447 = vmatmul.mubr.bf16.gmra.mxu0 %v391
  %v448 = vpop.f32.mrf.mxu0
  %v449 = vadd.f32 %v277, %v448
  %v450 = vpop.f32.mrf.mxu0
  %v451 = vpop.f32.mrf.mxu0
  %v452 = vadd.f32 %v278, %v451
  %v453 = vpop.f32.mrf.mxu0
  %454 = vmatprep.mubr.bf16.mxu0 0
  %455 = vmatmul.mubr.bf16.gmra.mxu0 %v394
  %v456 = vpop.f32.mrf.mxu0
  %v457 = vadd.f32 %v279, %v456
  %v458 = vpop.f32.mrf.mxu0
  %v459 = vpop.f32.mrf.mxu0
  %v460 = vadd.f32 %v280, %v459
  %v461 = vpop.f32.mrf.mxu0
  %462 = vmatprep.mubr.bf16.mxu0 0
  %463 = vmatmul.mubr.bf16.gmra.mxu0 %v397
  %v464 = vpop.f32.mrf.mxu0
  %v465 = vadd.f32 %v281, %v464
  %v466 = vpop.f32.mrf.mxu0
  %v467 = vpop.f32.mrf.mxu0
  %v468 = vadd.f32 %v282, %v467
  %v469 = vpop.f32.mrf.mxu0
  %470 = vmatprep.mubr.bf16.mxu0 0
  %471 = vmatmul.mubr.bf16.gmra.mxu0 %v400
  %v472 = vpop.f32.mrf.mxu0
  %v473 = vadd.f32 %v283, %v472
  %v474 = vpop.f32.mrf.mxu0
  %v475 = vpop.f32.mrf.mxu0
  %v476 = vadd.f32 %v284, %v475
  %v477 = vpop.f32.mrf.mxu0
  %478 = vdwg.mxu0
  %vm479 = vcmask 523264
  %v480 = vsel %vm479, %v449, -inf
  %481 = vmax.xlane.f32.xlu0 %v480
  %v482 = vpop.xlane.xlu0 %481
  %v483 = vsel %vm479, %v452, -inf
  %484 = vmax.xlane.f32.xlu0 %v483
  %v485 = vpop.xlane.xlu0 %484
  %v486 = vsel %vm479, %v457, -inf
  %487 = vmax.xlane.f32.xlu0 %v486
  %v488 = vpop.xlane.xlu0 %487
  %v489 = vsel %vm479, %v460, -inf
  %490 = vmax.xlane.f32.xlu0 %v489
  %v491 = vpop.xlane.xlu0 %490
  %v492 = vsel %vm479, %v465, -inf
  %493 = vmax.xlane.f32.xlu0 %v492
  %v494 = vpop.xlane.xlu0 %493
  %v495 = vsel %vm479, %v468, -inf
  %496 = vmax.xlane.f32.xlu0 %v495
  %v497 = vpop.xlane.xlu0 %496
  %v498 = vsel %vm479, %v473, -inf
  %499 = vmax.xlane.f32.xlu0 %v498
  %v500 = vpop.xlane.xlu0 %499
  %v501 = vsel %vm479, %v476, -inf
  %502 = vmax.xlane.f32.xlu0 %v501
  %v503 = vpop.xlane.xlu0 %502
  %v504 = vsub.f32 %v449, %v482
  %v505 = vsub.f32 %v452, %v485
  %v506 = vsub.f32 %v457, %v488
  %v507 = vsub.f32 %v460, %v491
  %v508 = vsub.f32 %v465, %v494
  %v509 = vsub.f32 %v468, %v497
  %v510 = vsub.f32 %v473, %v500
  %v511 = vsub.f32 %v476, %v503
  %v512 = vmul.f32 %v504, 1.442695
  %v513 = vpow.pop %v512
  %v514 = vmul.f32 %v505, 1.442695
  %v515 = vpow.pop %v514
  %v516 = vmul.f32 %v506, 1.442695
  %v517 = vpow.pop %v516
  %v518 = vmul.f32 %v507, 1.442695
  %v519 = vpow.pop %v518
  %v520 = vmul.f32 %v508, 1.442695
  %v521 = vpow.pop %v520
  %v522 = vmul.f32 %v509, 1.442695
  %v523 = vpow.pop %v522
  %v524 = vmul.f32 %v510, 1.442695
  %v525 = vpow.pop %v524
  %v526 = vmul.f32 %v511, 1.442695
  %v527 = vpow.pop %v526
  %v528 = vsel %vm479, %v513, 0.0
  %529 = vadd.xlane.f32.xlu0 %v528
  %v530 = vpop.xlane.xlu0 %529
  %v531 = vsel %vm479, %v515, 0.0
  %532 = vadd.xlane.f32.xlu0 %v531
  %v533 = vpop.xlane.xlu0 %532
  %v534 = vsel %vm479, %v517, 0.0
  %535 = vadd.xlane.f32.xlu0 %v534
  %v536 = vpop.xlane.xlu0 %535
  %v537 = vsel %vm479, %v519, 0.0
  %538 = vadd.xlane.f32.xlu0 %v537
  %v539 = vpop.xlane.xlu0 %538
  %v540 = vsel %vm479, %v521, 0.0
  %541 = vadd.xlane.f32.xlu0 %v540
  %v542 = vpop.xlane.xlu0 %541
  %v543 = vsel %vm479, %v523, 0.0
  %544 = vadd.xlane.f32.xlu0 %v543
  %v545 = vpop.xlane.xlu0 %544
  %v546 = vsel %vm479, %v525, 0.0
  %547 = vadd.xlane.f32.xlu0 %v546
  %v548 = vpop.xlane.xlu0 %547
  %v549 = vsel %vm479, %v527, 0.0
  %550 = vadd.xlane.f32.xlu0 %v549
  %v551 = vpop.xlane.xlu0 %550
  %v552 = vrcp.pop %v530
  %v553 = vrcp.pop %v533
  %v554 = vrcp.pop %v536
  %v555 = vrcp.pop %v539
  %v556 = vrcp.pop %v542
  %v557 = vrcp.pop %v545
  %v558 = vrcp.pop %v548
  %v559 = vrcp.pop %v551
  %v560 = vmul.f32 %v513, %v552
  %v561 = vmul.f32 %v515, %v553
  %v562 = vmul.f32 %v517, %v554
  %v563 = vmul.f32 %v519, %v555
  %v564 = vmul.f32 %v521, %v556
  %v565 = vmul.f32 %v523, %v557
  %v566 = vmul.f32 %v525, %v558
  %v567 = vmul.f32 %v527, %v559
  %v568 = vpack.c.bf16 %v561, %v560
  %v569 = vpack.c.bf16 %v563, %v562
  %v570 = vpack.c.bf16 %v565, %v564
  %v571 = vpack.c.bf16 %v567, %v566
  %572 = vrot.lane.b32.xlu0 %v373, 112
  %v573 = vpop.permute.xlu0 %572
  %574 = vrot.lane.b32.xlu0 %v374, 112
  %v575 = vpop.permute.xlu0 %574
  %576 = vrot.lane.b32.xlu0 %v375, 112
  %v577 = vpop.permute.xlu0 %576
  %578 = vrot.lane.b32.xlu0 %v376, 112
  %v579 = vpop.permute.xlu0 %578
  %v585 = vsel %vm479, %v568, 0
  %v588 = vsel %vm479, %v569, 0
  %v591 = vsel %vm479, %v570, 0
  %v594 = vsel %vm479, %v571, 0
  %596 = vmatprep.subr.bf16.mxu0 0
  %597 = vmatpush1.bf16.msra.mxu0 0
  %598 = vmatprep.subr.bf16.mxu0 0
  %599 = vmatpush1.bf16.msra.mxu0 0
  %600 = vmatprep.subr.bf16.mxu0 0
  %601 = vmatpush1.bf16.msra.mxu0 0
  %602 = vmatprep.subr.bf16.mxu0 0
  %603 = vmatpush1.bf16.msra.mxu0 0
  %604 = vmatprep.subr.bf16.mxu0 0
  %605 = vmatpush1.bf16.msra.mxu0 %v579
  %606 = vmatprep.subr.bf16.mxu0 0
  %607 = vmatpush1.bf16.msra.mxu0 %v577
  %608 = vmatprep.subr.bf16.mxu0 0
  %609 = vmatpush1.bf16.msra.mxu0 %v575
  %610 = vmatprep.subr.bf16.mxu0 0
  %611 = vmatpush1.bf16.msra.mxu0 %v573
  %612 = vmatprep.subr.bf16.mxu0 0
  %613 = vmatpush2.bf16.msra.mxu0 0
  %614 = vmatprep.subr.bf16.mxu0 0
  %615 = vmatpush2.bf16.msra.mxu0 0
  %616 = vmatprep.subr.bf16.mxu0 0
  %617 = vmatpush2.bf16.msra.mxu0 0
  %618 = vmatprep.subr.bf16.mxu0 0
  %619 = vmatpush2.bf16.msra.mxu0 0
  %620 = vmatprep.subr.bf16.mxu0 0
  %621 = vmatpush2.bf16.msra.mxu0 0
  %622 = vmatprep.subr.bf16.mxu0 0
  %623 = vmatpush2.bf16.msra.mxu0 0
  %624 = vmatprep.subr.bf16.mxu0 0
  %625 = vmatpush2.bf16.msra.mxu0 0
  %626 = vmatprep.subr.bf16.mxu0 0
  %627 = vmatpush2.bf16.msra.mxu0 0
  %628 = vmatprep.mubr.bf16.mxu0 0
  %629 = vmatmul.mubr.bf16.gmra.mxu0 %v585
  %v630 = vpop.f32.mrf.mxu0
  %v631 = vadd.f32 0.0, %v630
  %v632 = vpop.f32.mrf.mxu0
  %v633 = vpop.f32.mrf.mxu0
  %v634 = vadd.f32 0.0, %v633
  %v635 = vpop.f32.mrf.mxu0
  %636 = vmatprep.mubr.bf16.mxu0 0
  %637 = vmatmul.mubr.bf16.gmra.mxu0 %v588
  %v638 = vpop.f32.mrf.mxu0
  %v639 = vadd.f32 0.0, %v638
  %v640 = vpop.f32.mrf.mxu0
  %v641 = vpop.f32.mrf.mxu0
  %v642 = vadd.f32 0.0, %v641
  %v643 = vpop.f32.mrf.mxu0
  %644 = vmatprep.mubr.bf16.mxu0 0
  %645 = vmatmul.mubr.bf16.gmra.mxu0 %v591
  %v646 = vpop.f32.mrf.mxu0
  %v647 = vadd.f32 0.0, %v646
  %v648 = vpop.f32.mrf.mxu0
  %v649 = vpop.f32.mrf.mxu0
  %v650 = vadd.f32 0.0, %v649
  %v651 = vpop.f32.mrf.mxu0
  %652 = vmatprep.mubr.bf16.mxu0 0
  %653 = vmatmul.mubr.bf16.gmra.mxu0 %v594
  %v654 = vpop.f32.mrf.mxu0
  %v655 = vadd.f32 0.0, %v654
  %v656 = vpop.f32.mrf.mxu0
  %v657 = vpop.f32.mrf.mxu0
  %v658 = vadd.f32 0.0, %v657
  %v659 = vpop.f32.mrf.mxu0
  %660 = vdwg.mxu0
  %663 = vrot.lane.b32.xlu0 %v639, 8
  %v664 = vpop.permute.xlu0 %663
  %665 = vrot.lane.b32.xlu0 %v642, 8
  %v666 = vpop.permute.xlu0 %665
  %671 = vrot.lane.b32.xlu0 %v647, 16
  %v672 = vpop.permute.xlu0 %671
  %673 = vrot.lane.b32.xlu0 %v650, 16
  %v674 = vpop.permute.xlu0 %673
  %679 = vrot.lane.b32.xlu0 %v655, 24
  %v680 = vpop.permute.xlu0 %679
  %681 = vrot.lane.b32.xlu0 %v658, 24
  %v682 = vpop.permute.xlu0 %681
  %v685 = vsel %vm389, %v631, %v664
  %v686 = vsel %vm389, %v634, %v666
  %vm687 = vcmask 130048
  %v688 = vsel %vm687, %v685, %v672
  %v689 = vsel %vm687, %v686, %v674
  %vm690 = vcmask 195584
  %v691 = vsel %vm690, %v688, %v680
  %v692 = vsel %vm690, %v689, %v682
  %v693 = vpack.c.bf16 %v692, %v691
  %v694 = vld [vmem:[%s10] sm:$0xf]
  %v695 = vld [vmem:[%s10 + $0x4] sm:$0xf]
  %v696 = vld [vmem:[%s10 + $0x8] sm:$0xf]
  %v697 = vld [vmem:[%s10 + $0xc] sm:$0xf]
  %v698 = vld [vmem:[%s11] sm:$0x1]
  %v700 = vlaneseq
  %v701 = vshrl.u32 %v700, 7
  %v702 = vsub.s32 0, %v701
  %v703 = vrot.slane %v698, %v702
  %v709 = vunpack.c.l.b16 %v694
  %v710 = vunpack.c.l.b16 %v695
  %v711 = vunpack.c.l.b16 %v696
  %v712 = vunpack.c.l.b16 %v697
  %v713 = vpack.c.b16 %v710, %v709
  %v714 = vpack.c.b16 %v712, %v711
  %v718 = vsel %vm229, %v693, 0
  %720 = vmatprep.subr.bf16.mxu0 0
  %721 = vmatpush1.bf16.msra.mxu0 0
  %722 = vmatprep.subr.bf16.mxu0 0
  %723 = vmatpush1.bf16.msra.mxu0 0
  %724 = vmatprep.subr.bf16.mxu0 0
  %725 = vmatpush1.bf16.msra.mxu0 0
  %726 = vmatprep.subr.bf16.mxu0 0
  %727 = vmatpush1.bf16.msra.mxu0 0
  %728 = vmatprep.subr.bf16.mxu0 0
  %729 = vmatpush1.bf16.msra.mxu0 0
  %730 = vmatprep.subr.bf16.mxu0 0
  %731 = vmatpush1.bf16.msra.mxu0 0
  %732 = vmatprep.subr.bf16.mxu0 0
  %733 = vmatpush1.bf16.msra.mxu0 %v714
  %734 = vmatprep.subr.bf16.mxu0 0
  %735 = vmatpush1.bf16.msra.mxu0 %v713
  %736 = vmatprep.subr.bf16.mxu0 0
  %737 = vmatpush2.bf16.msra.mxu0 0
  %738 = vmatprep.subr.bf16.mxu0 0
  %739 = vmatpush2.bf16.msra.mxu0 0
  %740 = vmatprep.subr.bf16.mxu0 0
  %741 = vmatpush2.bf16.msra.mxu0 0
  %742 = vmatprep.subr.bf16.mxu0 0
  %743 = vmatpush2.bf16.msra.mxu0 0
  %744 = vmatprep.subr.bf16.mxu0 0
  %745 = vmatpush2.bf16.msra.mxu0 0
  %746 = vmatprep.subr.bf16.mxu0 0
  %747 = vmatpush2.bf16.msra.mxu0 0
  %748 = vmatprep.subr.bf16.mxu0 0
  %749 = vmatpush2.bf16.msra.mxu0 0
  %750 = vmatprep.subr.bf16.mxu0 0
  %751 = vmatpush2.bf16.msra.mxu0 0
  %752 = vmatprep.mubr.bf16.mxu0 0
  %753 = vmatmul.mubr.bf16.gmra.mxu0 %v718
  %v754 = vpop.f32.mrf.mxu0
  %v755 = vadd.f32 %v703, %v754
  %v756 = vpop.f32.mrf.mxu0
  %v757 = vpop.f32.mrf.mxu0
  %v758 = vadd.f32 %v703, %v757
  %v759 = vpop.f32.mrf.mxu0
  %760 = vdwg.mxu0
  %v761 = vadd.f32 %v755, %v275
  %v762 = vadd.f32 %v758, %v276
  %v763 = vld [vmem:[%s12] sm:$0x1]
  %v764 = vld [vmem:[%s13] sm:$0x1]
  %v765 = vsel %vm229, %v761, 0.0
  %766 = vadd.xlane.f32.xlu0 %v765
  %v767 = vpop.xlane.xlu0 %766
  %v768 = vsel %vm229, %v762, 0.0
  %769 = vadd.xlane.f32.xlu0 %v768
  %v770 = vpop.xlane.xlu0 %769
  %v771 = vmul.f32 %v767, %v236
  %v772 = vmul.f32 %v770, %v236
  %v773 = vmul.f32 %v761, %v761
  %v774 = vmul.f32 %v762, %v762
  %v775 = vsel %vm229, %v773, 0.0
  %776 = vadd.xlane.f32.xlu0 %v775
  %v777 = vpop.xlane.xlu0 %776
  %v778 = vsel %vm229, %v774, 0.0
  %779 = vadd.xlane.f32.xlu0 %v778
  %v780 = vpop.xlane.xlu0 %779
  %v781 = vmul.f32 %v777, %v236
  %v782 = vmul.f32 %v780, %v236
  %v783 = vmul.f32 %v771, %v771
  %v784 = vmul.f32 %v772, %v772
  %v785 = vsub.f32 %v781, %v783
  %v786 = vsub.f32 %v782, %v784
  %v787 = vsub.f32 %v761, %v771
  %v788 = vsub.f32 %v762, %v772
  %v789 = vadd.f32 %v785, 1e-12
  %v790 = vadd.f32 %v786, 1e-12
  %v791 = vrsqrt.pop %v789
  %v792 = vrsqrt.pop %v790
  %v793 = vmul.f32 %v787, %v791
  %v794 = vmul.f32 %v788, %v792
  %v796 = vlaneseq
  %v797 = vshrl.u32 %v796, 7
  %v798 = vsub.s32 0, %v797
  %v799 = vrot.slane %v763, %v798
  %v801 = vmul.f32 %v793, %v799
  %v802 = vmul.f32 %v794, %v799
  %v804 = vlaneseq
  %v805 = vshrl.u32 %v804, 7
  %v806 = vsub.s32 0, %v805
  %v807 = vrot.slane %v764, %v806
  %v809 = vadd.f32 %v801, %v807
  %v810 = vadd.f32 %v802, %v807
  %v811 = vpack.c.bf16 %v810, %v809
  %v812 = vld [vmem:[%s14] sm:$0xf]
  %v813 = vld [vmem:[%s14 + $0x4] sm:$0xf]
  %v814 = vld [vmem:[%s14 + $0x8] sm:$0xf]
  %v815 = vld [vmem:[%s14 + $0xc] sm:$0xf]
  %v816 = vld [vmem:[%s15] sm:$0x1]
  %v818 = vlaneseq
  %v819 = vshrl.u32 %v818, 7
  %v820 = vsub.s32 0, %v819
  %v821 = vrot.slane %v816, %v820
  %v827 = vunpack.c.l.b16 %v812
  %v828 = vunpack.c.l.b16 %v813
  %v829 = vunpack.c.l.b16 %v814
  %v830 = vunpack.c.l.b16 %v815
  %v831 = vpack.c.b16 %v828, %v827
  %v832 = vpack.c.b16 %v830, %v829
  %v836 = vsel %vm229, %v811, 0
  %838 = vmatprep.subr.bf16.mxu0 0
  %839 = vmatpush1.bf16.msra.mxu0 0
  %840 = vmatprep.subr.bf16.mxu0 0
  %841 = vmatpush1.bf16.msra.mxu0 0
  %842 = vmatprep.subr.bf16.mxu0 0
  %843 = vmatpush1.bf16.msra.mxu0 0
  %844 = vmatprep.subr.bf16.mxu0 0
  %845 = vmatpush1.bf16.msra.mxu0 0
  %846 = vmatprep.subr.bf16.mxu0 0
  %847 = vmatpush1.bf16.msra.mxu0 0
  %848 = vmatprep.subr.bf16.mxu0 0
  %849 = vmatpush1.bf16.msra.mxu0 0
  %850 = vmatprep.subr.bf16.mxu0 0
  %851 = vmatpush1.bf16.msra.mxu0 %v832
  %852 = vmatprep.subr.bf16.mxu0 0
  %853 = vmatpush1.bf16.msra.mxu0 %v831
  %854 = vmatprep.subr.bf16.mxu0 0
  %855 = vmatpush2.bf16.msra.mxu0 0
  %856 = vmatprep.subr.bf16.mxu0 0
  %857 = vmatpush2.bf16.msra.mxu0 0
  %858 = vmatprep.subr.bf16.mxu0 0
  %859 = vmatpush2.bf16.msra.mxu0 0
  %860 = vmatprep.subr.bf16.mxu0 0
  %861 = vmatpush2.bf16.msra.mxu0 0
  %862 = vmatprep.subr.bf16.mxu0 0
  %863 = vmatpush2.bf16.msra.mxu0 0
  %864 = vmatprep.subr.bf16.mxu0 0
  %865 = vmatpush2.bf16.msra.mxu0 0
  %866 = vmatprep.subr.bf16.mxu0 0
  %867 = vmatpush2.bf16.msra.mxu0 0
  %868 = vmatprep.subr.bf16.mxu0 0
  %869 = vmatpush2.bf16.msra.mxu0 0
  %870 = vmatprep.mubr.bf16.mxu0 0
  %871 = vmatmul.mubr.bf16.gmra.mxu0 %v836
  %v872 = vpop.f32.mrf.mxu0
  %v873 = vadd.f32 %v821, %v872
  %v874 = vpop.f32.mrf.mxu0
  %v875 = vpop.f32.mrf.mxu0
  %v876 = vadd.f32 %v821, %v875
  %v877 = vpop.f32.mrf.mxu0
  %878 = vdwg.mxu0
  %v879 = vmul.f32 %v873, 0.5
  %v880 = vmul.f32 %v876, 0.5
  %v881 = vmul.f32 %v873, 0.044715
  %v882 = vmul.f32 %v876, 0.044715
  %v883 = vmul.f32 %v881, %v873
  %v884 = vmul.f32 %v882, %v876
  %v885 = vmul.f32 %v883, %v873
  %v886 = vmul.f32 %v884, %v876
  %v887 = vadd.f32 %v873, %v885
  %v888 = vadd.f32 %v876, %v886
  %v889 = vmul.f32 %v887, 0.7978846
  %v890 = vmul.f32 %v888, 0.7978846
  %v891 = vtanh.pop %v889
  %v892 = vtanh.pop %v890
  %v893 = vadd.f32 %v891, 1.0
  %v894 = vadd.f32 %v892, 1.0
  %v895 = vmul.f32 %v879, %v893
  %v896 = vmul.f32 %v880, %v894
  %v897 = vpack.c.bf16 %v896, %v895
  %v898 = vld [vmem:[%s16] sm:$0xf]
  %v899 = vld [vmem:[%s16 + $0x4] sm:$0xf]
  %v900 = vld [vmem:[%s16 + $0x8] sm:$0xf]
  %v901 = vld [vmem:[%s16 + $0xc] sm:$0xf]
  %v902 = vld [vmem:[%s16 + $0x10] sm:$0xf]
  %v903 = vld [vmem:[%s16 + $0x14] sm:$0xf]
  %v904 = vld [vmem:[%s16 + $0x18] sm:$0xf]
  %v905 = vld [vmem:[%s16 + $0x1c] sm:$0xf]
  %v906 = vld [vmem:[%s17] sm:$0x1]
  %v908 = vlaneseq
  %v909 = vshrl.u32 %v908, 7
  %v910 = vsub.s32 0, %v909
  %v911 = vrot.slane %v906, %v910
  %v921 = vunpack.c.l.b16 %v898
  %v922 = vunpack.c.l.b16 %v899
  %v923 = vunpack.c.l.b16 %v900
  %v924 = vunpack.c.l.b16 %v901
  %v925 = vunpack.c.l.b16 %v902
  %v926 = vunpack.c.l.b16 %v903
  %v927 = vunpack.c.l.b16 %v904
  %v928 = vunpack.c.l.b16 %v905
  %v929 = vpack.c.b16 %v922, %v921
  %v930 = vpack.c.b16 %v924, %v923
  %v931 = vpack.c.b16 %v926, %v925
  %v932 = vpack.c.b16 %v928, %v927
  %v938 = vsel %vm479, %v897, 0
  %940 = vmatprep.subr.bf16.mxu0 0
  %941 = vmatpush1.bf16.msra.mxu0 0
  %942 = vmatprep.subr.bf16.mxu0 0
  %943 = vmatpush1.bf16.msra.mxu0 0
  %944 = vmatprep.subr.bf16.mxu0 0
  %945 = vmatpush1.bf16.msra.mxu0 0
  %946 = vmatprep.subr.bf16.mxu0 0
  %947 = vmatpush1.bf16.msra.mxu0 0
  %948 = vmatprep.subr.bf16.mxu0 0
  %949 = vmatpush1.bf16.msra.mxu0 %v932
  %950 = vmatprep.subr.bf16.mxu0 0
  %951 = vmatpush1.bf16.msra.mxu0 %v931
  %952 = vmatprep.subr.bf16.mxu0 0
  %953 = vmatpush1.bf16.msra.mxu0 %v930
  %954 = vmatprep.subr.bf16.mxu0 0
  %955 = vmatpush1.bf16.msra.mxu0 %v929
  %956 = vmatprep.subr.bf16.mxu0 0
  %957 = vmatpush2.bf16.msra.mxu0 0
  %958 = vmatprep.subr.bf16.mxu0 0
  %959 = vmatpush2.bf16.msra.mxu0 0
  %960 = vmatprep.subr.bf16.mxu0 0
  %961 = vmatpush2.bf16.msra.mxu0 0
  %962 = vmatprep.subr.bf16.mxu0 0
  %963 = vmatpush2.bf16.msra.mxu0 0
  %964 = vmatprep.subr.bf16.mxu0 0
  %965 = vmatpush2.bf16.msra.mxu0 0
  %966 = vmatprep.subr.bf16.mxu0 0
  %967 = vmatpush2.bf16.msra.mxu0 0
  %968 = vmatprep.subr.bf16.mxu0 0
  %969 = vmatpush2.bf16.msra.mxu0 0
  %970 = vmatprep.subr.bf16.mxu0 0
  %971 = vmatpush2.bf16.msra.mxu0 0
  %972 = vmatprep.mubr.bf16.mxu0 0
  %973 = vmatmul.mubr.bf16.gmra.mxu0 %v938
  %v974 = vpop.f32.mrf.mxu0
  %v975 = vadd.f32 %v911, %v974
  %v976 = vpop.f32.mrf.mxu0
  %v977 = vpop.f32.mrf.mxu0
  %v978 = vadd.f32 %v911, %v977
  %v979 = vpop.f32.mrf.mxu0
  %980 = vdwg.mxu0
  %v981 = vadd.f32 %v975, %v809
  %v982 = vadd.f32 %v978, %v810
  %v983 = vld [vmem:[%s18] sm:$0x1]
  %v984 = vld [vmem:[%s19] sm:$0x1]
  %v985 = vsel %vm229, %v981, 0.0
  %986 = vadd.xlane.f32.xlu0 %v985
  %v987 = vpop.xlane.xlu0 %986
  %v988 = vsel %vm229, %v982, 0.0
  %989 = vadd.xlane.f32.xlu0 %v988
  %v990 = vpop.xlane.xlu0 %989
  %v991 = vmul.f32 %v987, %v236
  %v992 = vmul.f32 %v990, %v236
  %v993 = vmul.f32 %v981, %v981
  %v994 = vmul.f32 %v982, %v982
  %v995 = vsel %vm229, %v993, 0.0
  %996 = vadd.xlane.f32.xlu0 %v995
  %v997 = vpop.xlane.xlu0 %996
  %v998 = vsel %vm229, %v994, 0.0
  %999 = vadd.xlane.f32.xlu0 %v998
  %v1000 = vpop.xlane.xlu0 %999
  %v1001 = vmul.f32 %v997, %v236
  %v1002 = vmul.f32 %v1000, %v236
  %v1003 = vmul.f32 %v991, %v991
  %v1004 = vmul.f32 %v992, %v992
  %v1005 = vsub.f32 %v1001, %v1003
  %v1006 = vsub.f32 %v1002, %v1004
  %v1007 = vsub.f32 %v981, %v991
  %v1008 = vsub.f32 %v982, %v992
  %v1009 = vadd.f32 %v1005, 1e-12
  %v1010 = vadd.f32 %v1006, 1e-12
  %v1011 = vrsqrt.pop %v1009
  %v1012 = vrsqrt.pop %v1010
  %v1013 = vmul.f32 %v1007, %v1011
  %v1014 = vmul.f32 %v1008, %v1012
  %v1016 = vlaneseq
  %v1017 = vshrl.u32 %v1016, 7
  %v1018 = vsub.s32 0, %v1017
  %v1019 = vrot.slane %v983, %v1018
  %v1021 = vmul.f32 %v1013, %v1019
  %v1022 = vmul.f32 %v1014, %v1019
  %v1024 = vlaneseq
  %v1025 = vshrl.u32 %v1024, 7
  %v1026 = vsub.s32 0, %v1025
  %v1027 = vrot.slane %v984, %v1026
  %v1029 = vadd.f32 %v1021, %v1027
  %v1030 = vadd.f32 %v1022, %v1027
  %v1031 = vpack.c.bf16 %v1030, %v1029
  %s1032 = scalar_lea.vmem %s8, 16
  %v1033 = vld [vmem:[%s1032] sm:$0xf]
  %v1034 = vld [vmem:[%s1032 + $0x4] sm:$0xf]
  %v1035 = vld [vmem:[%s1032 + $0x8] sm:$0xf]
  %v1036 = vld [vmem:[%s1032 + $0xc] sm:$0xf]
  %s1037 = scalar_lea.vmem %s9, 1
  %v1038 = vld [vmem:[%s1037] sm:$0x1]
  %v1040 = vlaneseq
  %v1041 = vshrl.u32 %v1040, 7
  %v1042 = vsub.s32 0, %v1041
  %v1043 = vrot.slane %v1038, %v1042
  %v1049 = vunpack.c.l.b16 %v1033
  %v1050 = vunpack.c.l.b16 %v1034
  %v1051 = vunpack.c.l.b16 %v1035
  %v1052 = vunpack.c.l.b16 %v1036
  %v1053 = vpack.c.b16 %v1050, %v1049
  %v1054 = vpack.c.b16 %v1052, %v1051
  %v1058 = vsel %vm229, %v1031, 0
  %1060 = vmatprep.subr.bf16.mxu0 0
  %1061 = vmatpush1.bf16.msra.mxu0 0
  %1062 = vmatprep.subr.bf16.mxu0 0
  %1063 = vmatpush1.bf16.msra.mxu0 0
  %1064 = vmatprep.subr.bf16.mxu0 0
  %1065 = vmatpush1.bf16.msra.mxu0 0
  %1066 = vmatprep.subr.bf16.mxu0 0
  %1067 = vmatpush1.bf16.msra.mxu0 0
  %1068 = vmatprep.subr.bf16.mxu0 0
  %1069 = vmatpush1.bf16.msra.mxu0 0
  %1070 = vmatprep.subr.bf16.mxu0 0
  %1071 = vmatpush1.bf16.msra.mxu0 0
  %1072 = vmatprep.subr.bf16.mxu0 0
  %1073 = vmatpush1.bf16.msra.mxu0 %v1054
  %1074 = vmatprep.subr.bf16.mxu0 0
  %1075 = vmatpush1.bf16.msra.mxu0 %v1053
  %1076 = vmatprep.subr.bf16.mxu0 0
  %1077 = vmatpush2.bf16.msra.mxu0 0
  %1078 = vmatprep.subr.bf16.mxu0 0
  %1079 = vmatpush2.bf16.msra.mxu0 0
  %1080 = vmatprep.subr.bf16.mxu0 0
  %1081 = vmatpush2.bf16.msra.mxu0 0
  %1082 = vmatprep.subr.bf16.mxu0 0
  %1083 = vmatpush2.bf16.msra.mxu0 0
  %1084 = vmatprep.subr.bf16.mxu0 0
  %1085 = vmatpush2.bf16.msra.mxu0 0
  %1086 = vmatprep.subr.bf16.mxu0 0
  %1087 = vmatpush2.bf16.msra.mxu0 0
  %1088 = vmatprep.subr.bf16.mxu0 0
  %1089 = vmatpush2.bf16.msra.mxu0 0
  %1090 = vmatprep.subr.bf16.mxu0 0
  %1091 = vmatpush2.bf16.msra.mxu0 0
  %1092 = vmatprep.mubr.bf16.mxu0 0
  %1093 = vmatmul.mubr.bf16.gmra.mxu0 %v1058
  %v1094 = vpop.f32.mrf.mxu0
  %v1095 = vadd.f32 %v1043, %v1094
  %v1096 = vpop.f32.mrf.mxu0
  %v1097 = vpop.f32.mrf.mxu0
  %v1098 = vadd.f32 %v1043, %v1097
  %v1099 = vpop.f32.mrf.mxu0
  %1100 = vdwg.mxu0
  %1103 = vrot.lane.b32.xlu0 %v1095, 104
  %v1104 = vpop.permute.xlu0 %1103
  %1105 = vrot.lane.b32.xlu0 %v1098, 104
  %v1106 = vpop.permute.xlu0 %1105
  %1109 = vrot.lane.b32.xlu0 %v1095, 80
  %v1110 = vpop.permute.xlu0 %1109
  %1111 = vrot.lane.b32.xlu0 %v1098, 80
  %v1112 = vpop.permute.xlu0 %1111
  %1115 = vrot.lane.b32.xlu0 %v1095, 56
  %v1116 = vpop.permute.xlu0 %1115
  %1117 = vrot.lane.b32.xlu0 %v1098, 56
  %v1118 = vpop.permute.xlu0 %1117
  %v1121 = vpack.c.bf16 %v1098, %v1095
  %v1122 = vpack.c.bf16 %v1106, %v1104
  %v1123 = vpack.c.bf16 %v1112, %v1110
  %v1124 = vpack.c.bf16 %v1118, %v1116
  %1129 = vrot.lane.b32.xlu0 %v1121, 120
  %v1130 = vpop.permute.xlu0 %1129
  %1131 = vrot.lane.b32.xlu0 %v1122, 120
  %v1132 = vpop.permute.xlu0 %1131
  %1133 = vrot.lane.b32.xlu0 %v1123, 120
  %v1134 = vpop.permute.xlu0 %1133
  %1135 = vrot.lane.b32.xlu0 %v1124, 120
  %v1136 = vpop.permute.xlu0 %1135
  %v1138 = vsel %vm389, %v1121, 0
  %v1141 = vsel %vm389, %v1122, 0
  %v1144 = vsel %vm389, %v1123, 0
  %v1147 = vsel %vm389, %v1124, 0
  %v1150 = vsel %vm389, %v1130, 0
  %v1153 = vsel %vm389, %v1132, 0
  %v1156 = vsel %vm389, %v1134, 0
  %v1159 = vsel %vm389, %v1136, 0
  %1161 = vmatprep.subr.bf16.mxu0 0
  %1162 = vmatpush1.bf16.xpose.msra.mxu0 0
  %1163 = vmatprep.subr.bf16.mxu0 0
  %1164 = vmatpush1.bf16.xpose.msra.mxu0 0
  %1165 = vmatprep.subr.bf16.mxu0 0
  %1166 = vmatpush1.bf16.xpose.msra.mxu0 0
  %1167 = vmatprep.subr.bf16.mxu0 0
  %1168 = vmatpush1.bf16.xpose.msra.mxu0 0
  %1169 = vmatprep.subr.bf16.mxu0 0
  %1170 = vmatpush1.bf16.xpose.msra.mxu0 %v1159
  %1171 = vmatprep.subr.bf16.mxu0 0
  %1172 = vmatpush1.bf16.xpose.msra.mxu0 %v1156
  %1173 = vmatprep.subr.bf16.mxu0 0
  %1174 = vmatpush1.bf16.xpose.msra.mxu0 %v1153
  %1175 = vmatprep.subr.bf16.mxu0 0
  %1176 = vmatpush1.bf16.xpose.msra.mxu0 %v1150
  %1177 = vmatprep.subr.bf16.mxu0 0
  %1178 = vmatpush2.bf16.xpose.msra.mxu0 0
  %1179 = vmatprep.subr.bf16.mxu0 0
  %1180 = vmatpush2.bf16.xpose.msra.mxu0 0
  %1181 = vmatprep.subr.bf16.mxu0 0
  %1182 = vmatpush2.bf16.xpose.msra.mxu0 0
  %1183 = vmatprep.subr.bf16.mxu0 0
  %1184 = vmatpush2.bf16.xpose.msra.mxu0 0
  %1185 = vmatprep.subr.bf16.mxu0 0
  %1186 = vmatpush2.bf16.xpose.msra.mxu0 0
  %1187 = vmatprep.subr.bf16.mxu0 0
  %1188 = vmatpush2.bf16.xpose.msra.mxu0 0
  %1189 = vmatprep.subr.bf16.mxu0 0
  %1190 = vmatpush2.bf16.xpose.msra.mxu0 0
  %1191 = vmatprep.subr.bf16.mxu0 0
  %1192 = vmatpush2.bf16.xpose.msra.mxu0 0
  %1193 = vmatprep.mubr.bf16.mxu0 0
  %1194 = vmatmul.mubr.bf16.gmra.mxu0 %v1138
  %v1195 = vpop.f32.mrf.mxu0
  %v1196 = vadd.f32 %v277, %v1195
  %v1197 = vpop.f32.mrf.mxu0
  %v1198 = vpop.f32.mrf.mxu0
  %v1199 = vadd.f32 %v278, %v1198
  %v1200 = vpop.f32.mrf.mxu0
  %1201 = vmatprep.mubr.bf16.mxu0 0
  %1202 = vmatmul.mubr.bf16.gmra.mxu0 %v1141
  %v1203 = vpop.f32.mrf.mxu0
  %v1204 = vadd.f32 %v279, %v1203
  %v1205 = vpop.f32.mrf.mxu0
  %v1206 = vpop.f32.mrf.mxu0
  %v1207 = vadd.f32 %v280, %v1206
  %v1208 = vpop.f32.mrf.mxu0
  %1209 = vmatprep.mubr.bf16.mxu0 0
  %1210 = vmatmul.mubr.bf16.gmra.mxu0 %v1144
  %v1211 = vpop.f32.mrf.mxu0
  %v1212 = vadd.f32 %v281, %v1211
  %v1213 = vpop.f32.mrf.mxu0
  %v1214 = vpop.f32.mrf.mxu0
  %v1215 = vadd.f32 %v282, %v1214
  %v1216 = vpop.f32.mrf.mxu0
  %1217 = vmatprep.mubr.bf16.mxu0 0
  %1218 = vmatmul.mubr.bf16.gmra.mxu0 %v1147
  %v1219 = vpop.f32.mrf.mxu0
  %v1220 = vadd.f32 %v283, %v1219
  %v1221 = vpop.f32.mrf.mxu0
  %v1222 = vpop.f32.mrf.mxu0
  %v1223 = vadd.f32 %v284, %v1222
  %v1224 = vpop.f32.mrf.mxu0
  %1225 = vdwg.mxu0
  %v1226 = vsel %vm479, %v1196, -inf
  %1227 = vmax.xlane.f32.xlu0 %v1226
  %v1228 = vpop.xlane.xlu0 %1227
  %v1229 = vsel %vm479, %v1199, -inf
  %1230 = vmax.xlane.f32.xlu0 %v1229
  %v1231 = vpop.xlane.xlu0 %1230
  %v1232 = vsel %vm479, %v1204, -inf
  %1233 = vmax.xlane.f32.xlu0 %v1232
  %v1234 = vpop.xlane.xlu0 %1233
  %v1235 = vsel %vm479, %v1207, -inf
  %1236 = vmax.xlane.f32.xlu0 %v1235
  %v1237 = vpop.xlane.xlu0 %1236
  %v1238 = vsel %vm479, %v1212, -inf
  %1239 = vmax.xlane.f32.xlu0 %v1238
  %v1240 = vpop.xlane.xlu0 %1239
  %v1241 = vsel %vm479, %v1215, -inf
  %1242 = vmax.xlane.f32.xlu0 %v1241
  %v1243 = vpop.xlane.xlu0 %1242
  %v1244 = vsel %vm479, %v1220, -inf
  %1245 = vmax.xlane.f32.xlu0 %v1244
  %v1246 = vpop.xlane.xlu0 %1245
  %v1247 = vsel %vm479, %v1223, -inf
  %1248 = vmax.xlane.f32.xlu0 %v1247
  %v1249 = vpop.xlane.xlu0 %1248
  %v1250 = vsub.f32 %v1196, %v1228
  %v1251 = vsub.f32 %v1199, %v1231
  %v1252 = vsub.f32 %v1204, %v1234
  %v1253 = vsub.f32 %v1207, %v1237
  %v1254 = vsub.f32 %v1212, %v1240
  %v1255 = vsub.f32 %v1215, %v1243
  %v1256 = vsub.f32 %v1220, %v1246
  %v1257 = vsub.f32 %v1223, %v1249
  %v1258 = vmul.f32 %v1250, 1.442695
  %v1259 = vpow.pop %v1258
  %v1260 = vmul.f32 %v1251, 1.442695
  %v1261 = vpow.pop %v1260
  %v1262 = vmul.f32 %v1252, 1.442695
  %v1263 = vpow.pop %v1262
  %v1264 = vmul.f32 %v1253, 1.442695
  %v1265 = vpow.pop %v1264
  %v1266 = vmul.f32 %v1254, 1.442695
  %v1267 = vpow.pop %v1266
  %v1268 = vmul.f32 %v1255, 1.442695
  %v1269 = vpow.pop %v1268
  %v1270 = vmul.f32 %v1256, 1.442695
  %v1271 = vpow.pop %v1270
  %v1272 = vmul.f32 %v1257, 1.442695
  %v1273 = vpow.pop %v1272
  %v1274 = vsel %vm479, %v1259, 0.0
  %1275 = vadd.xlane.f32.xlu0 %v1274
  %v1276 = vpop.xlane.xlu0 %1275
  %v1277 = vsel %vm479, %v1261, 0.0
  %1278 = vadd.xlane.f32.xlu0 %v1277
  %v1279 = vpop.xlane.xlu0 %1278
  %v1280 = vsel %vm479, %v1263, 0.0
  %1281 = vadd.xlane.f32.xlu0 %v1280
  %v1282 = vpop.xlane.xlu0 %1281
  %v1283 = vsel %vm479, %v1265, 0.0
  %1284 = vadd.xlane.f32.xlu0 %v1283
  %v1285 = vpop.xlane.xlu0 %1284
  %v1286 = vsel %vm479, %v1267, 0.0
  %1287 = vadd.xlane.f32.xlu0 %v1286
  %v1288 = vpop.xlane.xlu0 %1287
  %v1289 = vsel %vm479, %v1269, 0.0
  %1290 = vadd.xlane.f32.xlu0 %v1289
  %v1291 = vpop.xlane.xlu0 %1290
  %v1292 = vsel %vm479, %v1271, 0.0
  %1293 = vadd.xlane.f32.xlu0 %v1292
  %v1294 = vpop.xlane.xlu0 %1293
  %v1295 = vsel %vm479, %v1273, 0.0
  %1296 = vadd.xlane.f32.xlu0 %v1295
  %v1297 = vpop.xlane.xlu0 %1296
  %v1298 = vrcp.pop %v1276
  %v1299 = vrcp.pop %v1279
  %v1300 = vrcp.pop %v1282
  %v1301 = vrcp.pop %v1285
  %v1302 = vrcp.pop %v1288
  %v1303 = vrcp.pop %v1291
  %v1304 = vrcp.pop %v1294
  %v1305 = vrcp.pop %v1297
  %v1306 = vmul.f32 %v1259, %v1298
  %v1307 = vmul.f32 %v1261, %v1299
  %v1308 = vmul.f32 %v1263, %v1300
  %v1309 = vmul.f32 %v1265, %v1301
  %v1310 = vmul.f32 %v1267, %v1302
  %v1311 = vmul.f32 %v1269, %v1303
  %v1312 = vmul.f32 %v1271, %v1304
  %v1313 = vmul.f32 %v1273, %v1305
  %v1314 = vpack.c.bf16 %v1307, %v1306
  %v1315 = vpack.c.bf16 %v1309, %v1308
  %v1316 = vpack.c.bf16 %v1311, %v1310
  %v1317 = vpack.c.bf16 %v1313, %v1312
  %1318 = vrot.lane.b32.xlu0 %v1121, 112
  %v1319 = vpop.permute.xlu0 %1318
  %1320 = vrot.lane.b32.xlu0 %v1122, 112
  %v1321 = vpop.permute.xlu0 %1320
  %1322 = vrot.lane.b32.xlu0 %v1123, 112
  %v1323 = vpop.permute.xlu0 %1322
  %1324 = vrot.lane.b32.xlu0 %v1124, 112
  %v1325 = vpop.permute.xlu0 %1324
  %v1331 = vsel %vm479, %v1314, 0
  %v1334 = vsel %vm479, %v1315, 0
  %v1337 = vsel %vm479, %v1316, 0
  %v1340 = vsel %vm479, %v1317, 0
  %1342 = vmatprep.subr.bf16.mxu0 0
  %1343 = vmatpush1.bf16.msra.mxu0 0
  %1344 = vmatprep.subr.bf16.mxu0 0
  %1345 = vmatpush1.bf16.msra.mxu0 0
  %1346 = vmatprep.subr.bf16.mxu0 0
  %1347 = vmatpush1.bf16.msra.mxu0 0
  %1348 = vmatprep.subr.bf16.mxu0 0
  %1349 = vmatpush1.bf16.msra.mxu0 0
  %1350 = vmatprep.subr.bf16.mxu0 0
  %1351 = vmatpush1.bf16.msra.mxu0 %v1325
  %1352 = vmatprep.subr.bf16.mxu0 0
  %1353 = vmatpush1.bf16.msra.mxu0 %v1323
  %1354 = vmatprep.subr.bf16.mxu0 0
  %1355 = vmatpush1.bf16.msra.mxu0 %v1321
  %1356 = vmatprep.subr.bf16.mxu0 0
  %1357 = vmatpush1.bf16.msra.mxu0 %v1319
  %1358 = vmatprep.subr.bf16.mxu0 0
  %1359 = vmatpush2.bf16.msra.mxu0 0
  %1360 = vmatprep.subr.bf16.mxu0 0
  %1361 = vmatpush2.bf16.msra.mxu0 0
  %1362 = vmatprep.subr.bf16.mxu0 0
  %1363 = vmatpush2.bf16.msra.mxu0 0
  %1364 = vmatprep.subr.bf16.mxu0 0
  %1365 = vmatpush2.bf16.msra.mxu0 0
  %1366 = vmatprep.subr.bf16.mxu0 0
  %1367 = vmatpush2.bf16.msra.mxu0 0
  %1368 = vmatprep.subr.bf16.mxu0 0
  %1369 = vmatpush2.bf16.msra.mxu0 0
  %1370 = vmatprep.subr.bf16.mxu0 0
  %1371 = vmatpush2.bf16.msra.mxu0 0
  %1372 = vmatprep.subr.bf16.mxu0 0
  %1373 = vmatpush2.bf16.msra.mxu0 0
  %1374 = vmatprep.mubr.bf16.mxu0 0
  %1375 = vmatmul.mubr.bf16.gmra.mxu0 %v1331
  %v1376 = vpop.f32.mrf.mxu0
  %v1377 = vadd.f32 0.0, %v1376
  %v1378 = vpop.f32.mrf.mxu0
  %v1379 = vpop.f32.mrf.mxu0
  %v1380 = vadd.f32 0.0, %v1379
  %v1381 = vpop.f32.mrf.mxu0
  %1382 = vmatprep.mubr.bf16.mxu0 0
  %1383 = vmatmul.mubr.bf16.gmra.mxu0 %v1334
  %v1384 = vpop.f32.mrf.mxu0
  %v1385 = vadd.f32 0.0, %v1384
  %v1386 = vpop.f32.mrf.mxu0
  %v1387 = vpop.f32.mrf.mxu0
  %v1388 = vadd.f32 0.0, %v1387
  %v1389 = vpop.f32.mrf.mxu0
  %1390 = vmatprep.mubr.bf16.mxu0 0
  %1391 = vmatmul.mubr.bf16.gmra.mxu0 %v1337
  %v1392 = vpop.f32.mrf.mxu0
  %v1393 = vadd.f32 0.0, %v1392
  %v1394 = vpop.f32.mrf.mxu0
  %v1395 = vpop.f32.mrf.mxu0
  %v1396 = vadd.f32 0.0, %v1395
  %v1397 = vpop.f32.mrf.mxu0
  %1398 = vmatprep.mubr.bf16.mxu0 0
  %1399 = vmatmul.mubr.bf16.gmra.mxu0 %v1340
  %v1400 = vpop.f32.mrf.mxu0
  %v1401 = vadd.f32 0.0, %v1400
  %v1402 = vpop.f32.mrf.mxu0
  %v1403 = vpop.f32.mrf.mxu0
  %v1404 = vadd.f32 0.0, %v1403
  %v1405 = vpop.f32.mrf.mxu0
  %1406 = vdwg.mxu0
  %1409 = vrot.lane.b32.xlu0 %v1385, 8
  %v1410 = vpop.permute.xlu0 %1409
  %1411 = vrot.lane.b32.xlu0 %v1388, 8
  %v1412 = vpop.permute.xlu0 %1411
  %1417 = vrot.lane.b32.xlu0 %v1393, 16
  %v1418 = vpop.permute.xlu0 %1417
  %1419 = vrot.lane.b32.xlu0 %v1396, 16
  %v1420 = vpop.permute.xlu0 %1419
  %1425 = vrot.lane.b32.xlu0 %v1401, 24
  %v1426 = vpop.permute.xlu0 %1425
  %1427 = vrot.lane.b32.xlu0 %v1404, 24
  %v1428 = vpop.permute.xlu0 %1427
  %v1431 = vsel %vm389, %v1377, %v1410
  %v1432 = vsel %vm389, %v1380, %v1412
  %v1433 = vsel %vm687, %v1431, %v1418
  %v1434 = vsel %vm687, %v1432, %v1420
  %v1435 = vsel %vm690, %v1433, %v1426
  %v1436 = vsel %vm690, %v1434, %v1428
  %v1437 = vpack.c.bf16 %v1436, %v1435
  %s1438 = scalar_lea.vmem %s10, 16
  %v1439 = vld [vmem:[%s1438] sm:$0xf]
  %v1440 = vld [vmem:[%s1438 + $0x4] sm:$0xf]
  %v1441 = vld [vmem:[%s1438 + $0x8] sm:$0xf]
  %v1442 = vld [vmem:[%s1438 + $0xc] sm:$0xf]
  %s1443 = scalar_lea.vmem %s11, 1
  %v1444 = vld [vmem:[%s1443] sm:$0x1]
  %v1446 = vlaneseq
  %v1447 = vshrl.u32 %v1446, 7
  %v1448 = vsub.s32 0, %v1447
  %v1449 = vrot.slane %v1444, %v1448
  %v1455 = vunpack.c.l.b16 %v1439
  %v1456 = vunpack.c.l.b16 %v1440
  %v1457 = vunpack.c.l.b16 %v1441
  %v1458 = vunpack.c.l.b16 %v1442
  %v1459 = vpack.c.b16 %v1456, %v1455
  %v1460 = vpack.c.b16 %v1458, %v1457
  %v1464 = vsel %vm229, %v1437, 0
  %1466 = vmatprep.subr.bf16.mxu0 0
  %1467 = vmatpush1.bf16.msra.mxu0 0
  %1468 = vmatprep.subr.bf16.mxu0 0
  %1469 = vmatpush1.bf16.msra.mxu0 0
  %1470 = vmatprep.subr.bf16.mxu0 0
  %1471 = vmatpush1.bf16.msra.mxu0 0
  %1472 = vmatprep.subr.bf16.mxu0 0
  %1473 = vmatpush1.bf16.msra.mxu0 0
  %1474 = vmatprep.subr.bf16.mxu0 0
  %1475 = vmatpush1.bf16.msra.mxu0 0
  %1476 = vmatprep.subr.bf16.mxu0 0
  %1477 = vmatpush1.bf16.msra.mxu0 0
  %1478 = vmatprep.subr.bf16.mxu0 0
  %1479 = vmatpush1.bf16.msra.mxu0 %v1460
  %1480 = vmatprep.subr.bf16.mxu0 0
  %1481 = vmatpush1.bf16.msra.mxu0 %v1459
  %1482 = vmatprep.subr.bf16.mxu0 0
  %1483 = vmatpush2.bf16.msra.mxu0 0
  %1484 = vmatprep.subr.bf16.mxu0 0
  %1485 = vmatpush2.bf16.msra.mxu0 0
  %1486 = vmatprep.subr.bf16.mxu0 0
  %1487 = vmatpush2.bf16.msra.mxu0 0
  %1488 = vmatprep.subr.bf16.mxu0 0
  %1489 = vmatpush2.bf16.msra.mxu0 0
  %1490 = vmatprep.subr.bf16.mxu0 0
  %1491 = vmatpush2.bf16.msra.mxu0 0
  %1492 = vmatprep.subr.bf16.mxu0 0
  %1493 = vmatpush2.bf16.msra.mxu0 0
  %1494 = vmatprep.subr.bf16.mxu0 0
  %1495 = vmatpush2.bf16.msra.mxu0 0
  %1496 = vmatprep.subr.bf16.mxu0 0
  %1497 = vmatpush2.bf16.msra.mxu0 0
  %1498 = vmatprep.mubr.bf16.mxu0 0
  %1499 = vmatmul.mubr.bf16.gmra.mxu0 %v1464
  %v1500 = vpop.f32.mrf.mxu0
  %v1501 = vadd.f32 %v1449, %v1500
  %v1502 = vpop.f32.mrf.mxu0
  %v1503 = vpop.f32.mrf.mxu0
  %v1504 = vadd.f32 %v1449, %v1503
  %v1505 = vpop.f32.mrf.mxu0
  %1506 = vdwg.mxu0
  %v1507 = vadd.f32 %v1501, %v1029
  %v1508 = vadd.f32 %v1504, %v1030
  %s1509 = scalar_lea.vmem %s12, 1
  %v1510 = vld [vmem:[%s1509] sm:$0x1]
  %s1511 = scalar_lea.vmem %s13, 1
  %v1512 = vld [vmem:[%s1511] sm:$0x1]
  %v1513 = vsel %vm229, %v1507, 0.0
  %1514 = vadd.xlane.f32.xlu0 %v1513
  %v1515 = vpop.xlane.xlu0 %1514
  %v1516 = vsel %vm229, %v1508, 0.0
  %1517 = vadd.xlane.f32.xlu0 %v1516
  %v1518 = vpop.xlane.xlu0 %1517
  %v1519 = vmul.f32 %v1515, %v236
  %v1520 = vmul.f32 %v1518, %v236
  %v1521 = vmul.f32 %v1507, %v1507
  %v1522 = vmul.f32 %v1508, %v1508
  %v1523 = vsel %vm229, %v1521, 0.0
  %1524 = vadd.xlane.f32.xlu0 %v1523
  %v1525 = vpop.xlane.xlu0 %1524
  %v1526 = vsel %vm229, %v1522, 0.0
  %1527 = vadd.xlane.f32.xlu0 %v1526
  %v1528 = vpop.xlane.xlu0 %1527
  %v1529 = vmul.f32 %v1525, %v236
  %v1530 = vmul.f32 %v1528, %v236
  %v1531 = vmul.f32 %v1519, %v1519
  %v1532 = vmul.f32 %v1520, %v1520
  %v1533 = vsub.f32 %v1529, %v1531
  %v1534 = vsub.f32 %v1530, %v1532
  %v1535 = vsub.f32 %v1507, %v1519
  %v1536 = vsub.f32 %v1508, %v1520
  %v1537 = vadd.f32 %v1533, 1e-12
  %v1538 = vadd.f32 %v1534, 1e-12
  %v1539 = vrsqrt.pop %v1537
  %v1540 = vrsqrt.pop %v1538
  %v1541 = vmul.f32 %v1535, %v1539
  %v1542 = vmul.f32 %v1536, %v1540
  %v1544 = vlaneseq
  %v1545 = vshrl.u32 %v1544, 7
  %v1546 = vsub.s32 0, %v1545
  %v1547 = vrot.slane %v1510, %v1546
  %v1549 = vmul.f32 %v1541, %v1547
  %v1550 = vmul.f32 %v1542, %v1547
  %v1552 = vlaneseq
  %v1553 = vshrl.u32 %v1552, 7
  %v1554 = vsub.s32 0, %v1553
  %v1555 = vrot.slane %v1512, %v1554
  %v1557 = vadd.f32 %v1549, %v1555
  %v1558 = vadd.f32 %v1550, %v1555
  %v1559 = vpack.c.bf16 %v1558, %v1557
  %s1560 = scalar_lea.vmem %s14, 16
  %v1561 = vld [vmem:[%s1560] sm:$0xf]
  %v1562 = vld [vmem:[%s1560 + $0x4] sm:$0xf]
  %v1563 = vld [vmem:[%s1560 + $0x8] sm:$0xf]
  %v1564 = vld [vmem:[%s1560 + $0xc] sm:$0xf]
  %s1565 = scalar_lea.vmem %s15, 1
  %v1566 = vld [vmem:[%s1565] sm:$0x1]
  %v1568 = vlaneseq
  %v1569 = vshrl.u32 %v1568, 7
  %v1570 = vsub.s32 0, %v1569
  %v1571 = vrot.slane %v1566, %v1570
  %v1577 = vunpack.c.l.b16 %v1561
  %v1578 = vunpack.c.l.b16 %v1562
  %v1579 = vunpack.c.l.b16 %v1563
  %v1580 = vunpack.c.l.b16 %v1564
  %v1581 = vpack.c.b16 %v1578, %v1577
  %v1582 = vpack.c.b16 %v1580, %v1579
  %v1586 = vsel %vm229, %v1559, 0
  %1588 = vmatprep.subr.bf16.mxu0 0
  %1589 = vmatpush1.bf16.msra.mxu0 0
  %1590 = vmatprep.subr.bf16.mxu0 0
  %1591 = vmatpush1.bf16.msra.mxu0 0
  %1592 = vmatprep.subr.bf16.mxu0 0
  %1593 = vmatpush1.bf16.msra.mxu0 0
  %1594 = vmatprep.subr.bf16.mxu0 0
  %1595 = vmatpush1.bf16.msra.mxu0 0
  %1596 = vmatprep.subr.bf16.mxu0 0
  %1597 = vmatpush1.bf16.msra.mxu0 0
  %1598 = vmatprep.subr.bf16.mxu0 0
  %1599 = vmatpush1.bf16.msra.mxu0 0
  %1600 = vmatprep.subr.bf16.mxu0 0
  %1601 = vmatpush1.bf16.msra.mxu0 %v1582
  %1602 = vmatprep.subr.bf16.mxu0 0
  %1603 = vmatpush1.bf16.msra.mxu0 %v1581
  %1604 = vmatprep.subr.bf16.mxu0 0
  %1605 = vmatpush2.bf16.msra.mxu0 0
  %1606 = vmatprep.subr.bf16.mxu0 0
  %1607 = vmatpush2.bf16.msra.mxu0 0
  %1608 = vmatprep.subr.bf16.mxu0 0
  %1609 = vmatpush2.bf16.msra.mxu0 0
  %1610 = vmatprep.subr.bf16.mxu0 0
  %1611 = vmatpush2.bf16.msra.mxu0 0
  %1612 = vmatprep.subr.bf16.mxu0 0
  %1613 = vmatpush2.bf16.msra.mxu0 0
  %1614 = vmatprep.subr.bf16.mxu0 0
  %1615 = vmatpush2.bf16.msra.mxu0 0
  %1616 = vmatprep.subr.bf16.mxu0 0
  %1617 = vmatpush2.bf16.msra.mxu0 0
  %1618 = vmatprep.subr.bf16.mxu0 0
  %1619 = vmatpush2.bf16.msra.mxu0 0
  %1620 = vmatprep.mubr.bf16.mxu0 0
  %1621 = vmatmul.mubr.bf16.gmra.mxu0 %v1586
  %v1622 = vpop.f32.mrf.mxu0
  %v1623 = vadd.f32 %v1571, %v1622
  %v1624 = vpop.f32.mrf.mxu0
  %v1625 = vpop.f32.mrf.mxu0
  %v1626 = vadd.f32 %v1571, %v1625
  %v1627 = vpop.f32.mrf.mxu0
  %1628 = vdwg.mxu0
  %v1629 = vmul.f32 %v1623, 0.5
  %v1630 = vmul.f32 %v1626, 0.5
  %v1631 = vmul.f32 %v1623, 0.044715
  %v1632 = vmul.f32 %v1626, 0.044715
  %v1633 = vmul.f32 %v1631, %v1623
  %v1634 = vmul.f32 %v1632, %v1626
  %v1635 = vmul.f32 %v1633, %v1623
  %v1636 = vmul.f32 %v1634, %v1626
  %v1637 = vadd.f32 %v1623, %v1635
  %v1638 = vadd.f32 %v1626, %v1636
  %v1639 = vmul.f32 %v1637, 0.7978846
  %v1640 = vmul.f32 %v1638, 0.7978846
  %v1641 = vtanh.pop %v1639
  %v1642 = vtanh.pop %v1640
  %v1643 = vadd.f32 %v1641, 1.0
  %v1644 = vadd.f32 %v1642, 1.0
  %v1645 = vmul.f32 %v1629, %v1643
  %v1646 = vmul.f32 %v1630, %v1644
  %v1647 = vpack.c.bf16 %v1646, %v1645
  %s1648 = scalar_lea.vmem %s16, 32
  %v1649 = vld [vmem:[%s1648] sm:$0xf]
  %v1650 = vld [vmem:[%s1648 + $0x4] sm:$0xf]
  %v1651 = vld [vmem:[%s1648 + $0x8] sm:$0xf]
  %v1652 = vld [vmem:[%s1648 + $0xc] sm:$0xf]
  %v1653 = vld [vmem:[%s1648 + $0x10] sm:$0xf]
  %v1654 = vld [vmem:[%s1648 + $0x14] sm:$0xf]
  %v1655 = vld [vmem:[%s1648 + $0x18] sm:$0xf]
  %v1656 = vld [vmem:[%s1648 + $0x1c] sm:$0xf]
  %s1657 = scalar_lea.vmem %s17, 1
  %v1658 = vld [vmem:[%s1657] sm:$0x1]
  %v1660 = vlaneseq
  %v1661 = vshrl.u32 %v1660, 7
  %v1662 = vsub.s32 0, %v1661
  %v1663 = vrot.slane %v1658, %v1662
  %v1673 = vunpack.c.l.b16 %v1649
  %v1674 = vunpack.c.l.b16 %v1650
  %v1675 = vunpack.c.l.b16 %v1651
  %v1676 = vunpack.c.l.b16 %v1652
  %v1677 = vunpack.c.l.b16 %v1653
  %v1678 = vunpack.c.l.b16 %v1654
  %v1679 = vunpack.c.l.b16 %v1655
  %v1680 = vunpack.c.l.b16 %v1656
  %v1681 = vpack.c.b16 %v1674, %v1673
  %v1682 = vpack.c.b16 %v1676, %v1675
  %v1683 = vpack.c.b16 %v1678, %v1677
  %v1684 = vpack.c.b16 %v1680, %v1679
  %v1690 = vsel %vm479, %v1647, 0
  %1692 = vmatprep.subr.bf16.mxu0 0
  %1693 = vmatpush1.bf16.msra.mxu0 0
  %1694 = vmatprep.subr.bf16.mxu0 0
  %1695 = vmatpush1.bf16.msra.mxu0 0
  %1696 = vmatprep.subr.bf16.mxu0 0
  %1697 = vmatpush1.bf16.msra.mxu0 0
  %1698 = vmatprep.subr.bf16.mxu0 0
  %1699 = vmatpush1.bf16.msra.mxu0 0
  %1700 = vmatprep.subr.bf16.mxu0 0
  %1701 = vmatpush1.bf16.msra.mxu0 %v1684
  %1702 = vmatprep.subr.bf16.mxu0 0
  %1703 = vmatpush1.bf16.msra.mxu0 %v1683
  %1704 = vmatprep.subr.bf16.mxu0 0
  %1705 = vmatpush1.bf16.msra.mxu0 %v1682
  %1706 = vmatprep.subr.bf16.mxu0 0
  %1707 = vmatpush1.bf16.msra.mxu0 %v1681
  %1708 = vmatprep.subr.bf16.mxu0 0
  %1709 = vmatpush2.bf16.msra.mxu0 0
  %1710 = vmatprep.subr.bf16.mxu0 0
  %1711 = vmatpush2.bf16.msra.mxu0 0
  %1712 = vmatprep.subr.bf16.mxu0 0
  %1713 = vmatpush2.bf16.msra.mxu0 0
  %1714 = vmatprep.subr.bf16.mxu0 0
  %1715 = vmatpush2.bf16.msra.mxu0 0
  %1716 = vmatprep.subr.bf16.mxu0 0
  %1717 = vmatpush2.bf16.msra.mxu0 0
  %1718 = vmatprep.subr.bf16.mxu0 0
  %1719 = vmatpush2.bf16.msra.mxu0 0
  %1720 = vmatprep.subr.bf16.mxu0 0
  %1721 = vmatpush2.bf16.msra.mxu0 0
  %1722 = vmatprep.subr.bf16.mxu0 0
  %1723 = vmatpush2.bf16.msra.mxu0 0
  %1724 = vmatprep.mubr.bf16.mxu0 0
  %1725 = vmatmul.mubr.bf16.gmra.mxu0 %v1690
  %v1726 = vpop.f32.mrf.mxu0
  %v1727 = vadd.f32 %v1663, %v1726
  %v1728 = vpop.f32.mrf.mxu0
  %v1729 = vpop.f32.mrf.mxu0
  %v1730 = vadd.f32 %v1663, %v1729
  %v1731 = vpop.f32.mrf.mxu0
  %1732 = vdwg.mxu0
  %v1733 = vadd.f32 %v1727, %v1557
  %v1734 = vadd.f32 %v1730, %v1558
  %s1735 = scalar_lea.vmem %s18, 1
  %v1736 = vld [vmem:[%s1735] sm:$0x1]
  %s1737 = scalar_lea.vmem %s19, 1
  %v1738 = vld [vmem:[%s1737] sm:$0x1]
  %v1739 = vsel %vm229, %v1733, 0.0
  %1740 = vadd.xlane.f32.xlu0 %v1739
  %v1741 = vpop.xlane.xlu0 %1740
  %v1742 = vsel %vm229, %v1734, 0.0
  %1743 = vadd.xlane.f32.xlu0 %v1742
  %v1744 = vpop.xlane.xlu0 %1743
  %v1745 = vmul.f32 %v1741, %v236
  %v1746 = vmul.f32 %v1744, %v236
  %v1747 = vmul.f32 %v1733, %v1733
  %v1748 = vmul.f32 %v1734, %v1734
  %v1749 = vsel %vm229, %v1747, 0.0
  %1750 = vadd.xlane.f32.xlu0 %v1749
  %v1751 = vpop.xlane.xlu0 %1750
  %v1752 = vsel %vm229, %v1748, 0.0
  %1753 = vadd.xlane.f32.xlu0 %v1752
  %v1754 = vpop.xlane.xlu0 %1753
  %v1755 = vmul.f32 %v1751, %v236
  %v1756 = vmul.f32 %v1754, %v236
  %v1757 = vmul.f32 %v1745, %v1745
  %v1758 = vmul.f32 %v1746, %v1746
  %v1759 = vsub.f32 %v1755, %v1757
  %v1760 = vsub.f32 %v1756, %v1758
  %v1761 = vsub.f32 %v1733, %v1745
  %v1762 = vsub.f32 %v1734, %v1746
  %v1763 = vadd.f32 %v1759, 1e-12
  %v1764 = vadd.f32 %v1760, 1e-12
  %v1765 = vrsqrt.pop %v1763
  %v1766 = vrsqrt.pop %v1764
  %v1767 = vmul.f32 %v1761, %v1765
  %v1768 = vmul.f32 %v1762, %v1766
  %v1770 = vlaneseq
  %v1771 = vshrl.u32 %v1770, 7
  %v1772 = vsub.s32 0, %v1771
  %v1773 = vrot.slane %v1736, %v1772
  %v1775 = vmul.f32 %v1767, %v1773
  %v1776 = vmul.f32 %v1768, %v1773
  %v1778 = vlaneseq
  %v1779 = vshrl.u32 %v1778, 7
  %v1780 = vsub.s32 0, %v1779
  %v1781 = vrot.slane %v1738, %v1780
  %v1783 = vadd.f32 %v1775, %v1781
  %v1784 = vadd.f32 %v1776, %v1781
  %v1786 = vrot.slane %v1784, 7
  %vm1788 = vcmask 1040384
  %v1789 = vsel %vm1788, %v1783, %v1786
  %v1790 = vpack.c.bf16 %v1789, %v1789
  %v1791 = vld [vmem:[%s20] sm:$0xf]
  %v1792 = vld [vmem:[%s20 + $0x4] sm:$0xf]
  %v1793 = vld [vmem:[%s20 + $0x8] sm:$0xf]
  %v1794 = vld [vmem:[%s20 + $0xc] sm:$0xf]
  %v1795 = vld [vmem:[%s21] sm:$0x1]
  %v1797 = vlaneseq
  %v1798 = vshrl.u32 %v1797, 7
  %v1799 = vsub.s32 0, %v1798
  %v1800 = vrot.slane %v1795, %v1799
  %v1806 = vunpack.c.l.b16 %v1791
  %v1807 = vunpack.c.l.b16 %v1792
  %v1808 = vunpack.c.l.b16 %v1793
  %v1809 = vunpack.c.l.b16 %v1794
  %v1810 = vpack.c.b16 %v1807, %v1806
  %v1811 = vpack.c.b16 %v1809, %v1808
  %v1815 = vsel %vm229, %v1790, 0
  %1817 = vmatprep.subr.bf16.mxu0 0
  %1818 = vmatpush1.bf16.msra.mxu0 0
  %1819 = vmatprep.subr.bf16.mxu0 0
  %1820 = vmatpush1.bf16.msra.mxu0 0
  %1821 = vmatprep.subr.bf16.mxu0 0
  %1822 = vmatpush1.bf16.msra.mxu0 0
  %1823 = vmatprep.subr.bf16.mxu0 0
  %1824 = vmatpush1.bf16.msra.mxu0 0
  %1825 = vmatprep.subr.bf16.mxu0 0
  %1826 = vmatpush1.bf16.msra.mxu0 0
  %1827 = vmatprep.subr.bf16.mxu0 0
  %1828 = vmatpush1.bf16.msra.mxu0 0
  %1829 = vmatprep.subr.bf16.mxu0 0
  %1830 = vmatpush1.bf16.msra.mxu0 %v1811
  %1831 = vmatprep.subr.bf16.mxu0 0
  %1832 = vmatpush1.bf16.msra.mxu0 %v1810
  %1833 = vmatprep.subr.bf16.mxu0 0
  %1834 = vmatpush2.bf16.msra.mxu0 0
  %1835 = vmatprep.subr.bf16.mxu0 0
  %1836 = vmatpush2.bf16.msra.mxu0 0
  %1837 = vmatprep.subr.bf16.mxu0 0
  %1838 = vmatpush2.bf16.msra.mxu0 0
  %1839 = vmatprep.subr.bf16.mxu0 0
  %1840 = vmatpush2.bf16.msra.mxu0 0
  %1841 = vmatprep.subr.bf16.mxu0 0
  %1842 = vmatpush2.bf16.msra.mxu0 0
  %1843 = vmatprep.subr.bf16.mxu0 0
  %1844 = vmatpush2.bf16.msra.mxu0 0
  %1845 = vmatprep.subr.bf16.mxu0 0
  %1846 = vmatpush2.bf16.msra.mxu0 0
  %1847 = vmatprep.subr.bf16.mxu0 0
  %1848 = vmatpush2.bf16.msra.mxu0 0
  %1849 = vmatprep.mubr.bf16.mxu0 0
  %1850 = vmatmul.mubr.bf16.gmra.mxu0 %v1815
  %v1851 = vpop.f32.mrf.mxu0
  %v1852 = vadd.f32 %v1800, %v1851
  %v1853 = vpop.f32.mrf.mxu0
  %v1854 = vpop.f32.mrf.mxu0
  %v1855 = vpop.f32.mrf.mxu0
  %1856 = vdwg.mxu0
  %v1857 = vtanh.pop %v1852
  %v1858 = vld [vmem:[%s22] sm:$0x1]
  %v1860 = vlaneseq
  %v1861 = vshrl.u32 %v1860, 7
  %v1862 = vsub.s32 0, %v1861
  %v1863 = vrot.slane %v1858, %v1862
  %v1865 = vmul.f32 %v1857, %v1863
  %vm1866 = vcmask 254976
  %v1867 = vsel %vm1866, %v1865, 0.0
  %1868 = vadd.xlane.f32.xlu0 %v1867
  %v1869 = vpop.xlane.xlu0 %1868
  %v1870 = vld [vmem:[#allocation2] sm:$0x1]
  %v1872 = vlaneseq
  %v1873 = vshrl.u32 %v1872, 7
  %v1874 = vsub.s32 0, %v1873
  %v1875 = vrot.slane %v1870, %v1874
  %v1877 = vadd.f32 %v1869, %v1875
  %vm1878 = vcmask 1024
  %1879 = vst.msk [vmem:[%s24] sm:$0x3] %vm1878, %v1877
  // Predicated region
  $region98: #{bert_classifier_forward.1} parent=0 // pred_check
    _
  $region99: #{bert_classifier_forward.1} parent=0 // pred_check_branch
    %1881 = sbr.rel (0) target = $region101
  $region100: #{bert_classifier_forward.1} parent=0 // pred_region
    _
  $region101: #{bert_classifier_forward.1} parent=0 // pred_fallthru
    _
  // Predicated region
  $region102: #{bert_classifier_forward.1} parent=0 // pred_check
    _
  $region103: #{bert_classifier_forward.1} parent=0 // pred_check_branch
    %1883 = sbr.rel (0) target = $region105
  $region104: #{bert_classifier_forward.1} parent=0 // pred_region
    _
  $region105: #{bert_classifier_forward.1} parent=0 // pred_fallthru
    _

</llo_original>
